<compile_context>
chip_gen: v5e
topology: v5e:2x2
jax: 0.10.0
libtpu: 0.0.40
codegen_flags: <defaults>
</compile_context>

<pallas_src>
import jax
import jax.numpy as jnp
from jax import lax
from jax.experimental import pallas as pl
from jax.experimental.pallas import tpu as pltpu


def _round_up(x, m):
    return (x + m - 1) // m * m


def _padded_f32_bytes(shape):
    """Approximate VMEM footprint of an f32 buffer after (8,128) tiling."""
    if len(shape) == 0:
        return 4
    if len(shape) == 1:
        return _round_up(shape[0] * 4, 512)
    lead = 1
    for d in shape[:-2]:
        lead *= d
    return lead * _round_up(shape[-2], 8) * _round_up(shape[-1], 128) * 4


def _make_dense_block_kernel(num_layers, growth, H, W, nblk):
    """Fused DenseBlock kernel for static (num_layers, growth, H, W, nblk)."""
    G = growth
    C_total = G * (num_layers + 1)
    HW = H * W
    FRONT = _round_up(W + 1, 128)       # lane-aligned start of the interior
    # per-channel padded row: [unused | guard+top halo | interior | bottom halo+guard]
    ROW = FRONT + HW + W + 1

    # (dy, dx) taps in (ky, kx) order, matching the packed-weight K ordering.
    taps = [(ky - 1, kx - 1) for ky in range(3) for kx in range(3)]

    def kernel(*refs):
        x_ref = refs[0]                               # (nblk, G, HW)
        wb_refs = refs[1:1 + 2 * num_layers]          # [(G, 9*cin), (G, 1)] * L
        o_ref = refs[1 + 2 * num_layers]              # (nblk, C_total, HW)
        feat_ref = refs[2 + 2 * num_layers]           # VMEM (C_total, ROW)
        patch_ref = refs[3 + 2 * num_layers]          # VMEM (9*G*num_layers, HW)

        # Column masks for the horizontally shifted taps (x-1 < 0 / x+1 >= W):
        # the flattened layout has no width padding, so those lanes must be
        # zeroed explicitly.  Computed once per grid step.
        col = lax.broadcasted_iota(jnp.int32, (1, HW), 1) % W
        mask_l = (col != 0).astype(jnp.float32)
        mask_r = (col != (W - 1)).astype(jnp.float32)

        # Halo-only zeroing (top/bottom padded rows + 1-element guards).  Done
        # every grid step — never gated on program_id — so it is correct under
        # "parallel" megacore sharding.  Interior slots are always fully
        # rewritten before being read, so no full-buffer clear is needed.
        feat_ref[:, FRONT - (W + 1):FRONT] = jnp.zeros((C_total, W + 1), jnp.float32)
        feat_ref[:, FRONT + HW:FRONT + HW + W + 1] = jnp.zeros(
            (C_total, W + 1), jnp.float32)

        def append_taps(block_idx):
            """Append the 9 shifted tap slabs of channel block `block_idx`
            (growth channels) into the persistent im2col patch scratch."""
            c0 = block_idx * G
            base = block_idx * 9 * G
            for t, (dy, dx) in enumerate(taps):
                off = dy * W + dx
                slab = feat_ref[c0:c0 + G, FRONT + off:FRONT + off + HW]
                if dx == -1:
                    slab = slab * mask_l
                elif dx == 1:
                    slab = slab * mask_r
                patch_ref[base + t * G:base + (t + 1) * G, :] = slab

        for b in range(nblk):
            # Block input -> channel slot [0, G) of the resident feature map.
            feat_ref[0:G, FRONT:FRONT + HW] = x_ref[b].astype(jnp.float32)
            append_taps(0)

            for i in range(num_layers):
                cin = G * (i + 1)
                K = 9 * cin
                wt = wb_refs[2 * i][...]                    # (G, 9*cin), BN-folded
                bias = wb_refs[2 * i + 1][...]              # (G, 1), folded BN bias

                # One MXU contraction per layer, H*W lane-dense on the output.
                acc = jnp.dot(wt, patch_ref[0:K, :],
                              preferred_element_type=jnp.float32)   # (G, HW)
                y = acc + bias
                y = jnp.where(y > 0, y, 0.2 * y)            # LeakyReLU(0.2)

                # Dense concatenation: drop into the next channel slot.
                feat_ref[cin:cin + G, FRONT:FRONT + HW] = y
                if i + 1 < num_layers:
                    append_taps(i + 1)

            # Lane-dense store of the full concatenated slab (C_total, H*W).
            o_ref[b] = feat_ref[:, FRONT:FRONT + HW].astype(o_ref.dtype)

    return kernel


def dense_block_pallas(x_nchw, params, batch_block=None):
    """Full DenseBlock forward. Input/output are NCHW like PyTorch."""
    N, C0, H, W = x_nchw.shape
    num_layers = len(params)
    assert num_layers >= 1
    G = C0
    C_total = G * (num_layers + 1)
    HW = H * W

    if batch_block is None:
        # Whole batch per grid step for tiny batches (per-step overhead
        # dominates at these sizes); split into two steps for larger batches
        # so v7x megacore can shard the batch axis across its TensorCores.
        if N <= 4:
            batch_block = N
        else:
            half = (N + 1) // 2
            batch_block = max(d for d in range(1, half + 1) if N % d == 0)
    assert N % batch_block == 0
    nblk = batch_block

    # NCHW row-major is already channel-major / spatial-on-lanes: free reshape.
    x = x_nchw.reshape(N, C0, HW)

    flat_params = []
    in_specs = [pl.BlockSpec((nblk, C0, HW), lambda n: (n, 0, 0))]
    for i, (w_hwio, scale, bias) in enumerate(params):
        cin = G * (i + 1)
        nb = i + 1
        # Fold BN scale into the conv weight and pack K as
        # (channel_block, tap, channel_within_block) so each layer appends a
        # contiguous 9*G-row stripe to the persistent im2col patch.
        w_s = (w_hwio * scale).astype(jnp.float32)                 # (3,3,cin,G)
        w_k = jnp.transpose(w_s.reshape(3, 3, nb, G, G), (2, 0, 1, 3, 4))
        w_packed = w_k.reshape(nb * 9 * G, G).T                    # (G, 9*cin)
        b = bias.reshape(G, 1).astype(jnp.float32)
        flat_params += [w_packed, b]
        in_specs += [pl.BlockSpec((G, 9 * cin), lambda n: (0, 0)),
                     pl.BlockSpec((G, 1), lambda n: (0, 0))]

    FRONT = _round_up(W + 1, 128)
    ROW = FRONT + HW + W + 1
    feat_shape = (C_total, ROW)
    patch_shape = (9 * G * num_layers, HW)

    # Derive the VMEM budget from the actual footprint (scratch + double-
    # buffered in/out blocks + params) instead of a hard-coded number.
    footprint = (_padded_f32_bytes(feat_shape) + _padded_f32_bytes(patch_shape)
                 + 2 * (_padded_f32_bytes((nblk, C0, HW))
                        + _padded_f32_bytes((nblk, C_total, HW))
                        + sum(_padded_f32_bytes(p.shape) for p in flat_params)))
    vmem_limit = min(max(4 * 1024 * 1024, int(footprint * 1.5) + (1 << 20)),
                     96 * 1024 * 1024)

    kernel = _make_dense_block_kernel(num_layers, G, H, W, nblk)

    out = pl.pallas_call(
        kernel,
        out_shape=jax.ShapeDtypeStruct((N, C_total, HW), x.dtype),
        grid=(N // nblk,),
        in_specs=in_specs,
        out_specs=pl.BlockSpec((nblk, C_total, HW), lambda n: (n, 0, 0)),
        scratch_shapes=[pltpu.VMEM(feat_shape, jnp.float32),
                        pltpu.VMEM(patch_shape, jnp.float32)],
        compiler_params=pltpu.CompilerParams(
            dimension_semantics=("parallel",),
            vmem_limit_bytes=vmem_limit),
    )(x, *flat_params)

    return out.reshape(N, C_total, H, W)                            # NCHW


def init_dense_block_params(key, num_layers, growth, eps=1e-5):
    """Deterministic parameters. Returns list of (w_hwio, scale, bias) per layer."""
    params = []
    for i in range(num_layers):
        cin = growth * (i + 1)
        cout = growth
        key, k_w, k_b, k_g, k_be, k_m, k_v = jax.random.split(key, 7)
        w = 0.1 * jax.random.normal(k_w, (3, 3, cin, cout), jnp.float32)   # HWIO
        conv_b = 0.1 * jax.random.normal(k_b, (cout,), jnp.float32)
        gamma = 1.0 + 0.1 * jax.random.normal(k_g, (cout,), jnp.float32)
        beta = 0.1 * jax.random.normal(k_be, (cout,), jnp.float32)
        run_mean = 0.1 * jax.random.normal(k_m, (cout,), jnp.float32)
        run_var = 1.0 + 0.1 * jnp.abs(jax.random.normal(k_v, (cout,), jnp.float32))
        scale = gamma / jnp.sqrt(run_var + eps)
        bias = (conv_b - run_mean) * scale + beta
        params.append((w, scale, bias))
    return params


def dense_block_ref(x_nchw, params):
    """Pure-JAX reference (same math) for verification."""
    x = jnp.transpose(x_nchw, (0, 2, 3, 1))
    feats = [x]
    for (w, scale, bias) in params:
        inp = jnp.concatenate(feats, axis=-1)
        conv = lax.conv_general_dilated(
            inp, w, window_strides=(1, 1), padding="SAME",
            dimension_numbers=("NHWC", "HWIO", "NHWC"))
        y = conv * scale + bias
        y = jnp.where(y > 0, y, 0.2 * y)
        feats.append(y)
    y = jnp.concatenate(feats, axis=-1)
    return jnp.transpose(y, (0, 3, 1, 2))


if __name__ == "__main__":
    num_layers, growth = 3, 4
    N, H, W = 2, 16, 16

    key = jax.random.PRNGKey(0)
    key, kx = jax.random.split(key)
    x = jax.random.normal(kx, (N, growth, H, W), jnp.float32)   # NCHW like PyTorch

    params = init_dense_block_params(key, num_layers, growth)

    out = dense_block_pallas(x, params)
    out = jax.block_until_ready(out)

    ref = dense_block_ref(x, params)
    assert out.shape == (N, growth * (num_layers + 1), H, W), out.shape
    assert jnp.allclose(out, ref, atol=1e-4, rtol=1e-4), float(
        jnp.max(jnp.abs(out - ref)))

    print("KERNEL_OK")
</pallas_src>

<mosaic_0001>
module attributes {stable_mosaic.version = 11 : i64} {
  func.func @kernel(%arg0: i32, %arg1: memref<2x4x256xf32, #tpu.memory_space<vmem>>, %arg2: memref<4x36xf32, #tpu.memory_space<vmem>>, %arg3: memref<4x1xf32, #tpu.memory_space<vmem>>, %arg4: memref<4x72xf32, #tpu.memory_space<vmem>>, %arg5: memref<4x1xf32, #tpu.memory_space<vmem>>, %arg6: memref<4x108xf32, #tpu.memory_space<vmem>>, %arg7: memref<4x1xf32, #tpu.memory_space<vmem>>, %arg8: memref<2x16x256xf32, #tpu.memory_space<vmem>>, %arg9: memref<16x401xf32, #tpu.memory_space<vmem>>, %arg10: memref<108x256xf32, #tpu.memory_space<vmem>>) attributes {dimension_semantics = [#tpu.dimension_semantics<parallel>], iteration_bounds = array<i64: 1>, scalar_prefetch = 0 : i64, scratch_operands = 2 : i64, tpu.core_type = #tpu.core_type<tc>, window_params = [{transform_indices = @transform_0, window_bounds = array<i64: 2, 4, 256>}, {pipeline_mode = #tpu.pipeline_mode<synchronous>, transform_indices = @transform_1, window_bounds = array<i64: 4, 36>}, {pipeline_mode = #tpu.pipeline_mode<synchronous>, transform_indices = @transform_2, window_bounds = array<i64: 4, 1>}, {pipeline_mode = #tpu.pipeline_mode<synchronous>, transform_indices = @transform_3, window_bounds = array<i64: 4, 72>}, {pipeline_mode = #tpu.pipeline_mode<synchronous>, transform_indices = @transform_4, window_bounds = array<i64: 4, 1>}, {pipeline_mode = #tpu.pipeline_mode<synchronous>, transform_indices = @transform_5, window_bounds = array<i64: 4, 108>}, {pipeline_mode = #tpu.pipeline_mode<synchronous>, transform_indices = @transform_6, window_bounds = array<i64: 4, 1>}, {transform_indices = @transform_7, window_bounds = array<i64: 2, 16, 256>}]} {
    %0 = tpu.iota {dimensions = array<i32: 1>} : vector<1x256xi32>
    %c16_i32 = arith.constant 16 : i32
    %c0_i32 = arith.constant 0 : i32
    %1 = arith.cmpi eq, %c16_i32, %c0_i32 : i32
    %c1_i32 = arith.constant 1 : i32
    %2 = arith.select %1, %c1_i32, %c16_i32 : i32
    %3 = vector.broadcast %2 : i32 to vector<1x256xi32>
    %4 = arith.remsi %0, %3 : vector<1x256xi32>
    %c0_i32_0 = arith.constant 0 : i32
    %5 = vector.broadcast %c0_i32_0 : i32 to vector<1x256xi32>
    %6 = arith.cmpi ne, %4, %5 : vector<1x256xi32>
    %c0_i32_1 = arith.constant 0 : i32
    %7 = vector.broadcast %c0_i32_1 : i32 to vector<1x256xi32>
    %8 = arith.cmpi slt, %4, %7 : vector<1x256xi32>
    %c0_i32_2 = arith.constant 0 : i32
    %9 = arith.cmpi slt, %2, %c0_i32_2 : i32
    %10 = vector.broadcast %9 : i1 to vector<1x256xi1>
    %11 = vector.broadcast %10 : vector<1x256xi1> to vector<1x256xi1>
    %12 = arith.xori %8, %11 : vector<1x256xi1>
    %13 = arith.andi %12, %6 : vector<1x256xi1>
    %14 = vector.broadcast %2 : i32 to vector<1x256xi32>
    %15 = arith.addi %4, %14 : vector<1x256xi32>
    %16 = arith.select %13, %15, %4 : vector<1x256xi1>, vector<1x256xi32>
    %c0_i32_3 = arith.constant 0 : i32
    %17 = vector.broadcast %c0_i32_3 : i32 to vector<1x256xi32>
    %18 = arith.cmpi ne, %16, %17 : vector<1x256xi32>
    %19 = arith.extui %18 : vector<1x256xi1> to vector<1x256xi32>
    %20 = arith.sitofp %19 : vector<1x256xi32> to vector<1x256xf32>
    %c15_i32 = arith.constant 15 : i32
    %21 = vector.broadcast %c15_i32 : i32 to vector<1x256xi32>
    %22 = arith.cmpi ne, %16, %21 : vector<1x256xi32>
    %23 = arith.extui %22 : vector<1x256xi1> to vector<1x256xi32>
    %24 = arith.sitofp %23 : vector<1x256xi32> to vector<1x256xf32>
    %cst = arith.constant 0.000000e+00 : f32
    %25 = vector.broadcast %cst : f32 to vector<16x17xf32>
    %c0 = arith.constant 0 : index
    %c111 = arith.constant 111 : index
    %26 = vector.load %arg9[%c0, %c111] : memref<16x401xf32, #tpu.memory_space<vmem>>, vector<16x17xf32>
    tpu.vector_store %arg9[%c0, %c111], %25 {strides = array<i32>} : memref<16x401xf32, #tpu.memory_space<vmem>>, vector<16x17xf32>,
    %cst_4 = arith.constant 0.000000e+00 : f32
    %27 = vector.broadcast %cst_4 : f32 to vector<16x17xf32>
    %c0_5 = arith.constant 0 : index
    %c384 = arith.constant 384 : index
    %28 = vector.load %arg9[%c0_5, %c384] : memref<16x401xf32, #tpu.memory_space<vmem>>, vector<16x17xf32>
    tpu.vector_store %arg9[%c0_5, %c384], %27 {strides = array<i32>} : memref<16x401xf32, #tpu.memory_space<vmem>>, vector<16x17xf32>,
    %c0_6 = arith.constant 0 : index
    %c0_7 = arith.constant 0 : index
    %c0_8 = arith.constant 0 : index
    %29 = vector.load %arg1[%c0_6, %c0_7, %c0_8] : memref<2x4x256xf32, #tpu.memory_space<vmem>>, vector<1x4x256xf32>
    %30 = vector.shape_cast %29 : vector<1x4x256xf32> to vector<4x256xf32>
    %c0_9 = arith.constant 0 : index
    %c128 = arith.constant 128 : index
    %31 = vector.load %arg9[%c0_9, %c128] : memref<16x401xf32, #tpu.memory_space<vmem>>, vector<4x256xf32>
    tpu.vector_store %arg9[%c0_9, %c128], %30 {strides = array<i32>} : memref<16x401xf32, #tpu.memory_space<vmem>>, vector<4x256xf32>,
    %c0_10 = arith.constant 0 : index
    %c111_11 = arith.constant 111 : index
    %32 = vector.load %arg9[%c0_10, %c111_11] : memref<16x401xf32, #tpu.memory_space<vmem>>, vector<4x256xf32>
    %33 = vector.broadcast %20 : vector<1x256xf32> to vector<4x256xf32>
    %34 = arith.mulf %32, %33 : vector<4x256xf32>
    %c0_12 = arith.constant 0 : index
    %c0_13 = arith.constant 0 : index
    %35 = vector.load %arg10[%c0_12, %c0_13] : memref<108x256xf32, #tpu.memory_space<vmem>>, vector<4x256xf32>
    tpu.vector_store %arg10[%c0_12, %c0_13], %34 {strides = array<i32>} : memref<108x256xf32, #tpu.memory_space<vmem>>, vector<4x256xf32>,
    %c0_14 = arith.constant 0 : index
    %c112 = arith.constant 112 : index
    %36 = vector.load %arg9[%c0_14, %c112] : memref<16x401xf32, #tpu.memory_space<vmem>>, vector<4x256xf32>
    %c4 = arith.constant 4 : index
    %c0_15 = arith.constant 0 : index
    %37 = vector.load %arg10[%c4, %c0_15] : memref<108x256xf32, #tpu.memory_space<vmem>>, vector<4x256xf32>
    tpu.vector_store %arg10[%c4, %c0_15], %36 {strides = array<i32>} : memref<108x256xf32, #tpu.memory_space<vmem>>, vector<4x256xf32>,
    %c0_16 = arith.constant 0 : index
    %c113 = arith.constant 113 : index
    %38 = vector.load %arg9[%c0_16, %c113] : memref<16x401xf32, #tpu.memory_space<vmem>>, vector<4x256xf32>
    %39 = vector.broadcast %24 : vector<1x256xf32> to vector<4x256xf32>
    %40 = arith.mulf %38, %39 : vector<4x256xf32>
    %c8 = arith.constant 8 : index
    %c0_17 = arith.constant 0 : index
    %41 = vector.load %arg10[%c8, %c0_17] : memref<108x256xf32, #tpu.memory_space<vmem>>, vector<4x256xf32>
    tpu.vector_store %arg10[%c8, %c0_17], %40 {strides = array<i32>} : memref<108x256xf32, #tpu.memory_space<vmem>>, vector<4x256xf32>,
    %c0_18 = arith.constant 0 : index
    %c127 = arith.constant 127 : index
    %42 = vector.load %arg9[%c0_18, %c127] : memref<16x401xf32, #tpu.memory_space<vmem>>, vector<4x256xf32>
    %43 = vector.broadcast %20 : vector<1x256xf32> to vector<4x256xf32>
    %44 = arith.mulf %42, %43 : vector<4x256xf32>
    %c12 = arith.constant 12 : index
    %c0_19 = arith.constant 0 : index
    %45 = vector.load %arg10[%c12, %c0_19] : memref<108x256xf32, #tpu.memory_space<vmem>>, vector<4x256xf32>
    tpu.vector_store %arg10[%c12, %c0_19], %44 {strides = array<i32>} : memref<108x256xf32, #tpu.memory_space<vmem>>, vector<4x256xf32>,
    %c0_20 = arith.constant 0 : index
    %c128_21 = arith.constant 128 : index
    %46 = vector.load %arg9[%c0_20, %c128_21] : memref<16x401xf32, #tpu.memory_space<vmem>>, vector<4x256xf32>
    %c16 = arith.constant 16 : index
    %c0_22 = arith.constant 0 : index
    %47 = vector.load %arg10[%c16, %c0_22] : memref<108x256xf32, #tpu.memory_space<vmem>>, vector<4x256xf32>
    tpu.vector_store %arg10[%c16, %c0_22], %46 {strides = array<i32>} : memref<108x256xf32, #tpu.memory_space<vmem>>, vector<4x256xf32>,
    %c0_23 = arith.constant 0 : index
    %c129 = arith.constant 129 : index
    %48 = vector.load %arg9[%c0_23, %c129] : memref<16x401xf32, #tpu.memory_space<vmem>>, vector<4x256xf32>
    %49 = vector.broadcast %24 : vector<1x256xf32> to vector<4x256xf32>
    %50 = arith.mulf %48, %49 : vector<4x256xf32>
    %c20 = arith.constant 20 : index
    %c0_24 = arith.constant 0 : index
    %51 = vector.load %arg10[%c20, %c0_24] : memref<108x256xf32, #tpu.memory_space<vmem>>, vector<4x256xf32>
    tpu.vector_store %arg10[%c20, %c0_24], %50 {strides = array<i32>} : memref<108x256xf32, #tpu.memory_space<vmem>>, vector<4x256xf32>,
    %c0_25 = arith.constant 0 : index
    %c143 = arith.constant 143 : index
    %52 = vector.load %arg9[%c0_25, %c143] : memref<16x401xf32, #tpu.memory_space<vmem>>, vector<4x256xf32>
    %53 = vector.broadcast %20 : vector<1x256xf32> to vector<4x256xf32>
    %54 = arith.mulf %52, %53 : vector<4x256xf32>
    %c24 = arith.constant 24 : index
    %c0_26 = arith.constant 0 : index
    %55 = vector.load %arg10[%c24, %c0_26] : memref<108x256xf32, #tpu.memory_space<vmem>>, vector<4x256xf32>
    tpu.vector_store %arg10[%c24, %c0_26], %54 {strides = array<i32>} : memref<108x256xf32, #tpu.memory_space<vmem>>, vector<4x256xf32>,
    %c0_27 = arith.constant 0 : index
    %c144 = arith.constant 144 : index
    %56 = vector.load %arg9[%c0_27, %c144] : memref<16x401xf32, #tpu.memory_space<vmem>>, vector<4x256xf32>
    %c28 = arith.constant 28 : index
    %c0_28 = arith.constant 0 : index
    %57 = vector.load %arg10[%c28, %c0_28] : memref<108x256xf32, #tpu.memory_space<vmem>>, vector<4x256xf32>
    tpu.vector_store %arg10[%c28, %c0_28], %56 {strides = array<i32>} : memref<108x256xf32, #tpu.memory_space<vmem>>, vector<4x256xf32>,
    %c0_29 = arith.constant 0 : index
    %c145 = arith.constant 145 : index
    %58 = vector.load %arg9[%c0_29, %c145] : memref<16x401xf32, #tpu.memory_space<vmem>>, vector<4x256xf32>
    %59 = vector.broadcast %24 : vector<1x256xf32> to vector<4x256xf32>
    %60 = arith.mulf %58, %59 : vector<4x256xf32>
    %c32 = arith.constant 32 : index
    %c0_30 = arith.constant 0 : index
    %61 = vector.load %arg10[%c32, %c0_30] : memref<108x256xf32, #tpu.memory_space<vmem>>, vector<4x256xf32>
    tpu.vector_store %arg10[%c32, %c0_30], %60 {strides = array<i32>} : memref<108x256xf32, #tpu.memory_space<vmem>>, vector<4x256xf32>,
    %c0_31 = arith.constant 0 : index
    %c0_32 = arith.constant 0 : index
    %62 = vector.load %arg2[%c0_31, %c0_32] : memref<4x36xf32, #tpu.memory_space<vmem>>, vector<4x36xf32>
    %c0_33 = arith.constant 0 : index
    %c0_34 = arith.constant 0 : index
    %63 = vector.load %arg3[%c0_33, %c0_34] : memref<4x1xf32, #tpu.memory_space<vmem>>, vector<4x1xf32>
    %c0_35 = arith.constant 0 : index
    %c0_36 = arith.constant 0 : index
    %64 = vector.load %arg10[%c0_35, %c0_36] : memref<108x256xf32, #tpu.memory_space<vmem>>, vector<36x256xf32>
    %cst_37 = arith.constant dense<0.000000e+00> : vector<4x256xf32>
    %65 = tpu.matmul %62, %64, %cst_37 {dimension_numbers = #tpu.dot_dimension_numbers<[1], [0], [0], [1], [0, 0, 1, 1], [], []>} : vector<4x36xf32>, vector<36x256xf32>, vector<4x256xf32> -> vector<4x256xf32>
    %66 = vector.broadcast %63 : vector<4x1xf32> to vector<4x256xf32>
    %67 = arith.addf %65, %66 : vector<4x256xf32>
    %cst_38 = arith.constant 0.000000e+00 : f32
    %68 = vector.broadcast %cst_38 : f32 to vector<4x256xf32>
    %69 = arith.cmpf ogt, %67, %68 : vector<4x256xf32>
    %cst_39 = arith.constant 2.000000e-01 : f32
    %70 = vector.broadcast %cst_39 : f32 to vector<4x256xf32>
    %71 = arith.mulf %70, %67 : vector<4x256xf32>
    %72 = arith.select %69, %67, %71 : vector<4x256xi1>, vector<4x256xf32>
    %c4_40 = arith.constant 4 : index
    %c128_41 = arith.constant 128 : index
    %73 = vector.load %arg9[%c4_40, %c128_41] : memref<16x401xf32, #tpu.memory_space<vmem>>, vector<4x256xf32>
    tpu.vector_store %arg9[%c4_40, %c128_41], %72 {strides = array<i32>} : memref<16x401xf32, #tpu.memory_space<vmem>>, vector<4x256xf32>,
    %c4_42 = arith.constant 4 : index
    %c111_43 = arith.constant 111 : index
    %74 = vector.load %arg9[%c4_42, %c111_43] : memref<16x401xf32, #tpu.memory_space<vmem>>, vector<4x256xf32>
    %75 = vector.broadcast %20 : vector<1x256xf32> to vector<4x256xf32>
    %76 = arith.mulf %74, %75 : vector<4x256xf32>
    %c36 = arith.constant 36 : index
    %c0_44 = arith.constant 0 : index
    %77 = vector.load %arg10[%c36, %c0_44] : memref<108x256xf32, #tpu.memory_space<vmem>>, vector<4x256xf32>
    tpu.vector_store %arg10[%c36, %c0_44], %76 {strides = array<i32>} : memref<108x256xf32, #tpu.memory_space<vmem>>, vector<4x256xf32>,
    %c4_45 = arith.constant 4 : index
    %c112_46 = arith.constant 112 : index
    %78 = vector.load %arg9[%c4_45, %c112_46] : memref<16x401xf32, #tpu.memory_space<vmem>>, vector<4x256xf32>
    %c40 = arith.constant 40 : index
    %c0_47 = arith.constant 0 : index
    %79 = vector.load %arg10[%c40, %c0_47] : memref<108x256xf32, #tpu.memory_space<vmem>>, vector<4x256xf32>
    tpu.vector_store %arg10[%c40, %c0_47], %78 {strides = array<i32>} : memref<108x256xf32, #tpu.memory_space<vmem>>, vector<4x256xf32>,
    %c4_48 = arith.constant 4 : index
    %c113_49 = arith.constant 113 : index
    %80 = vector.load %arg9[%c4_48, %c113_49] : memref<16x401xf32, #tpu.memory_space<vmem>>, vector<4x256xf32>
    %81 = vector.broadcast %24 : vector<1x256xf32> to vector<4x256xf32>
    %82 = arith.mulf %80, %81 : vector<4x256xf32>
    %c44 = arith.constant 44 : index
    %c0_50 = arith.constant 0 : index
    %83 = vector.load %arg10[%c44, %c0_50] : memref<108x256xf32, #tpu.memory_space<vmem>>, vector<4x256xf32>
    tpu.vector_store %arg10[%c44, %c0_50], %82 {strides = array<i32>} : memref<108x256xf32, #tpu.memory_space<vmem>>, vector<4x256xf32>,
    %c4_51 = arith.constant 4 : index
    %c127_52 = arith.constant 127 : index
    %84 = vector.load %arg9[%c4_51, %c127_52] : memref<16x401xf32, #tpu.memory_space<vmem>>, vector<4x256xf32>
    %85 = vector.broadcast %20 : vector<1x256xf32> to vector<4x256xf32>
    %86 = arith.mulf %84, %85 : vector<4x256xf32>
    %c48 = arith.constant 48 : index
    %c0_53 = arith.constant 0 : index
    %87 = vector.load %arg10[%c48, %c0_53] : memref<108x256xf32, #tpu.memory_space<vmem>>, vector<4x256xf32>
    tpu.vector_store %arg10[%c48, %c0_53], %86 {strides = array<i32>} : memref<108x256xf32, #tpu.memory_space<vmem>>, vector<4x256xf32>,
    %c4_54 = arith.constant 4 : index
    %c128_55 = arith.constant 128 : index
    %88 = vector.load %arg9[%c4_54, %c128_55] : memref<16x401xf32, #tpu.memory_space<vmem>>, vector<4x256xf32>
    %c52 = arith.constant 52 : index
    %c0_56 = arith.constant 0 : index
    %89 = vector.load %arg10[%c52, %c0_56] : memref<108x256xf32, #tpu.memory_space<vmem>>, vector<4x256xf32>
    tpu.vector_store %arg10[%c52, %c0_56], %88 {strides = array<i32>} : memref<108x256xf32, #tpu.memory_space<vmem>>, vector<4x256xf32>,
    %c4_57 = arith.constant 4 : index
    %c129_58 = arith.constant 129 : index
    %90 = vector.load %arg9[%c4_57, %c129_58] : memref<16x401xf32, #tpu.memory_space<vmem>>, vector<4x256xf32>
    %91 = vector.broadcast %24 : vector<1x256xf32> to vector<4x256xf32>
    %92 = arith.mulf %90, %91 : vector<4x256xf32>
    %c56 = arith.constant 56 : index
    %c0_59 = arith.constant 0 : index
    %93 = vector.load %arg10[%c56, %c0_59] : memref<108x256xf32, #tpu.memory_space<vmem>>, vector<4x256xf32>
    tpu.vector_store %arg10[%c56, %c0_59], %92 {strides = array<i32>} : memref<108x256xf32, #tpu.memory_space<vmem>>, vector<4x256xf32>,
    %c4_60 = arith.constant 4 : index
    %c143_61 = arith.constant 143 : index
    %94 = vector.load %arg9[%c4_60, %c143_61] : memref<16x401xf32, #tpu.memory_space<vmem>>, vector<4x256xf32>
    %95 = vector.broadcast %20 : vector<1x256xf32> to vector<4x256xf32>
    %96 = arith.mulf %94, %95 : vector<4x256xf32>
    %c60 = arith.constant 60 : index
    %c0_62 = arith.constant 0 : index
    %97 = vector.load %arg10[%c60, %c0_62] : memref<108x256xf32, #tpu.memory_space<vmem>>, vector<4x256xf32>
    tpu.vector_store %arg10[%c60, %c0_62], %96 {strides = array<i32>} : memref<108x256xf32, #tpu.memory_space<vmem>>, vector<4x256xf32>,
    %c4_63 = arith.constant 4 : index
    %c144_64 = arith.constant 144 : index
    %98 = vector.load %arg9[%c4_63, %c144_64] : memref<16x401xf32, #tpu.memory_space<vmem>>, vector<4x256xf32>
    %c64 = arith.constant 64 : index
    %c0_65 = arith.constant 0 : index
    %99 = vector.load %arg10[%c64, %c0_65] : memref<108x256xf32, #tpu.memory_space<vmem>>, vector<4x256xf32>
    tpu.vector_store %arg10[%c64, %c0_65], %98 {strides = array<i32>} : memref<108x256xf32, #tpu.memory_space<vmem>>, vector<4x256xf32>,
    %c4_66 = arith.constant 4 : index
    %c145_67 = arith.constant 145 : index
    %100 = vector.load %arg9[%c4_66, %c145_67] : memref<16x401xf32, #tpu.memory_space<vmem>>, vector<4x256xf32>
    %101 = vector.broadcast %24 : vector<1x256xf32> to vector<4x256xf32>
    %102 = arith.mulf %100, %101 : vector<4x256xf32>
    %c68 = arith.constant 68 : index
    %c0_68 = arith.constant 0 : index
    %103 = vector.load %arg10[%c68, %c0_68] : memref<108x256xf32, #tpu.memory_space<vmem>>, vector<4x256xf32>
    tpu.vector_store %arg10[%c68, %c0_68], %102 {strides = array<i32>} : memref<108x256xf32, #tpu.memory_space<vmem>>, vector<4x256xf32>,
    %c0_69 = arith.constant 0 : index
    %c0_70 = arith.constant 0 : index
    %104 = vector.load %arg4[%c0_69, %c0_70] : memref<4x72xf32, #tpu.memory_space<vmem>>, vector<4x72xf32>
    %c0_71 = arith.constant 0 : index
    %c0_72 = arith.constant 0 : index
    %105 = vector.load %arg5[%c0_71, %c0_72] : memref<4x1xf32, #tpu.memory_space<vmem>>, vector<4x1xf32>
    %c0_73 = arith.constant 0 : index
    %c0_74 = arith.constant 0 : index
    %106 = vector.load %arg10[%c0_73, %c0_74] : memref<108x256xf32, #tpu.memory_space<vmem>>, vector<72x256xf32>
    %cst_75 = arith.constant dense<0.000000e+00> : vector<4x256xf32>
    %107 = tpu.matmul %104, %106, %cst_75 {dimension_numbers = #tpu.dot_dimension_numbers<[1], [0], [0], [1], [0, 0, 1, 1], [], []>} : vector<4x72xf32>, vector<72x256xf32>, vector<4x256xf32> -> vector<4x256xf32>
    %108 = vector.broadcast %105 : vector<4x1xf32> to vector<4x256xf32>
    %109 = arith.addf %107, %108 : vector<4x256xf32>
    %cst_76 = arith.constant 0.000000e+00 : f32
    %110 = vector.broadcast %cst_76 : f32 to vector<4x256xf32>
    %111 = arith.cmpf ogt, %109, %110 : vector<4x256xf32>
    %cst_77 = arith.constant 2.000000e-01 : f32
    %112 = vector.broadcast %cst_77 : f32 to vector<4x256xf32>
    %113 = arith.mulf %112, %109 : vector<4x256xf32>
    %114 = arith.select %111, %109, %113 : vector<4x256xi1>, vector<4x256xf32>
    %c8_78 = arith.constant 8 : index
    %c128_79 = arith.constant 128 : index
    %115 = vector.load %arg9[%c8_78, %c128_79] : memref<16x401xf32, #tpu.memory_space<vmem>>, vector<4x256xf32>
    tpu.vector_store %arg9[%c8_78, %c128_79], %114 {strides = array<i32>} : memref<16x401xf32, #tpu.memory_space<vmem>>, vector<4x256xf32>,
    %c8_80 = arith.constant 8 : index
    %c111_81 = arith.constant 111 : index
    %116 = vector.load %arg9[%c8_80, %c111_81] : memref<16x401xf32, #tpu.memory_space<vmem>>, vector<4x256xf32>
    %117 = vector.broadcast %20 : vector<1x256xf32> to vector<4x256xf32>
    %118 = arith.mulf %116, %117 : vector<4x256xf32>
    %c72 = arith.constant 72 : index
    %c0_82 = arith.constant 0 : index
    %119 = vector.load %arg10[%c72, %c0_82] : memref<108x256xf32, #tpu.memory_space<vmem>>, vector<4x256xf32>
    tpu.vector_store %arg10[%c72, %c0_82], %118 {strides = array<i32>} : memref<108x256xf32, #tpu.memory_space<vmem>>, vector<4x256xf32>,
    %c8_83 = arith.constant 8 : index
    %c112_84 = arith.constant 112 : index
    %120 = vector.load %arg9[%c8_83, %c112_84] : memref<16x401xf32, #tpu.memory_space<vmem>>, vector<4x256xf32>
    %c76 = arith.constant 76 : index
    %c0_85 = arith.constant 0 : index
    %121 = vector.load %arg10[%c76, %c0_85] : memref<108x256xf32, #tpu.memory_space<vmem>>, vector<4x256xf32>
    tpu.vector_store %arg10[%c76, %c0_85], %120 {strides = array<i32>} : memref<108x256xf32, #tpu.memory_space<vmem>>, vector<4x256xf32>,
    %c8_86 = arith.constant 8 : index
    %c113_87 = arith.constant 113 : index
    %122 = vector.load %arg9[%c8_86, %c113_87] : memref<16x401xf32, #tpu.memory_space<vmem>>, vector<4x256xf32>
    %123 = vector.broadcast %24 : vector<1x256xf32> to vector<4x256xf32>
    %124 = arith.mulf %122, %123 : vector<4x256xf32>
    %c80 = arith.constant 80 : index
    %c0_88 = arith.constant 0 : index
    %125 = vector.load %arg10[%c80, %c0_88] : memref<108x256xf32, #tpu.memory_space<vmem>>, vector<4x256xf32>
    tpu.vector_store %arg10[%c80, %c0_88], %124 {strides = array<i32>} : memref<108x256xf32, #tpu.memory_space<vmem>>, vector<4x256xf32>,
    %c8_89 = arith.constant 8 : index
    %c127_90 = arith.constant 127 : index
    %126 = vector.load %arg9[%c8_89, %c127_90] : memref<16x401xf32, #tpu.memory_space<vmem>>, vector<4x256xf32>
    %127 = vector.broadcast %20 : vector<1x256xf32> to vector<4x256xf32>
    %128 = arith.mulf %126, %127 : vector<4x256xf32>
    %c84 = arith.constant 84 : index
    %c0_91 = arith.constant 0 : index
    %129 = vector.load %arg10[%c84, %c0_91] : memref<108x256xf32, #tpu.memory_space<vmem>>, vector<4x256xf32>
    tpu.vector_store %arg10[%c84, %c0_91], %128 {strides = array<i32>} : memref<108x256xf32, #tpu.memory_space<vmem>>, vector<4x256xf32>,
    %c8_92 = arith.constant 8 : index
    %c128_93 = arith.constant 128 : index
    %130 = vector.load %arg9[%c8_92, %c128_93] : memref<16x401xf32, #tpu.memory_space<vmem>>, vector<4x256xf32>
    %c88 = arith.constant 88 : index
    %c0_94 = arith.constant 0 : index
    %131 = vector.load %arg10[%c88, %c0_94] : memref<108x256xf32, #tpu.memory_space<vmem>>, vector<4x256xf32>
    tpu.vector_store %arg10[%c88, %c0_94], %130 {strides = array<i32>} : memref<108x256xf32, #tpu.memory_space<vmem>>, vector<4x256xf32>,
    %c8_95 = arith.constant 8 : index
    %c129_96 = arith.constant 129 : index
    %132 = vector.load %arg9[%c8_95, %c129_96] : memref<16x401xf32, #tpu.memory_space<vmem>>, vector<4x256xf32>
    %133 = vector.broadcast %24 : vector<1x256xf32> to vector<4x256xf32>
    %134 = arith.mulf %132, %133 : vector<4x256xf32>
    %c92 = arith.constant 92 : index
    %c0_97 = arith.constant 0 : index
    %135 = vector.load %arg10[%c92, %c0_97] : memref<108x256xf32, #tpu.memory_space<vmem>>, vector<4x256xf32>
    tpu.vector_store %arg10[%c92, %c0_97], %134 {strides = array<i32>} : memref<108x256xf32, #tpu.memory_space<vmem>>, vector<4x256xf32>,
    %c8_98 = arith.constant 8 : index
    %c143_99 = arith.constant 143 : index
    %136 = vector.load %arg9[%c8_98, %c143_99] : memref<16x401xf32, #tpu.memory_space<vmem>>, vector<4x256xf32>
    %137 = vector.broadcast %20 : vector<1x256xf32> to vector<4x256xf32>
    %138 = arith.mulf %136, %137 : vector<4x256xf32>
    %c96 = arith.constant 96 : index
    %c0_100 = arith.constant 0 : index
    %139 = vector.load %arg10[%c96, %c0_100] : memref<108x256xf32, #tpu.memory_space<vmem>>, vector<4x256xf32>
    tpu.vector_store %arg10[%c96, %c0_100], %138 {strides = array<i32>} : memref<108x256xf32, #tpu.memory_space<vmem>>, vector<4x256xf32>,
    %c8_101 = arith.constant 8 : index
    %c144_102 = arith.constant 144 : index
    %140 = vector.load %arg9[%c8_101, %c144_102] : memref<16x401xf32, #tpu.memory_space<vmem>>, vector<4x256xf32>
    %c100 = arith.constant 100 : index
    %c0_103 = arith.constant 0 : index
    %141 = vector.load %arg10[%c100, %c0_103] : memref<108x256xf32, #tpu.memory_space<vmem>>, vector<4x256xf32>
    tpu.vector_store %arg10[%c100, %c0_103], %140 {strides = array<i32>} : memref<108x256xf32, #tpu.memory_space<vmem>>, vector<4x256xf32>,
    %c8_104 = arith.constant 8 : index
    %c145_105 = arith.constant 145 : index
    %142 = vector.load %arg9[%c8_104, %c145_105] : memref<16x401xf32, #tpu.memory_space<vmem>>, vector<4x256xf32>
    %143 = vector.broadcast %24 : vector<1x256xf32> to vector<4x256xf32>
    %144 = arith.mulf %142, %143 : vector<4x256xf32>
    %c104 = arith.constant 104 : index
    %c0_106 = arith.constant 0 : index
    %145 = vector.load %arg10[%c104, %c0_106] : memref<108x256xf32, #tpu.memory_space<vmem>>, vector<4x256xf32>
    tpu.vector_store %arg10[%c104, %c0_106], %144 {strides = array<i32>} : memref<108x256xf32, #tpu.memory_space<vmem>>, vector<4x256xf32>,
    %c0_107 = arith.constant 0 : index
    %c0_108 = arith.constant 0 : index
    %146 = vector.load %arg6[%c0_107, %c0_108] : memref<4x108xf32, #tpu.memory_space<vmem>>, vector<4x108xf32>
    %c0_109 = arith.constant 0 : index
    %c0_110 = arith.constant 0 : index
    %147 = vector.load %arg7[%c0_109, %c0_110] : memref<4x1xf32, #tpu.memory_space<vmem>>, vector<4x1xf32>
    %c0_111 = arith.constant 0 : index
    %c0_112 = arith.constant 0 : index
    %148 = vector.load %arg10[%c0_111, %c0_112] : memref<108x256xf32, #tpu.memory_space<vmem>>, vector<108x256xf32>
    %cst_113 = arith.constant dense<0.000000e+00> : vector<4x256xf32>
    %149 = tpu.matmul %146, %148, %cst_113 {dimension_numbers = #tpu.dot_dimension_numbers<[1], [0], [0], [1], [0, 0, 1, 1], [], []>} : vector<4x108xf32>, vector<108x256xf32>, vector<4x256xf32> -> vector<4x256xf32>
    %150 = vector.broadcast %147 : vector<4x1xf32> to vector<4x256xf32>
    %151 = arith.addf %149, %150 : vector<4x256xf32>
    %cst_114 = arith.constant 0.000000e+00 : f32
    %152 = vector.broadcast %cst_114 : f32 to vector<4x256xf32>
    %153 = arith.cmpf ogt, %151, %152 : vector<4x256xf32>
    %cst_115 = arith.constant 2.000000e-01 : f32
    %154 = vector.broadcast %cst_115 : f32 to vector<4x256xf32>
    %155 = arith.mulf %154, %151 : vector<4x256xf32>
    %156 = arith.select %153, %151, %155 : vector<4x256xi1>, vector<4x256xf32>
    %c12_116 = arith.constant 12 : index
    %c128_117 = arith.constant 128 : index
    %157 = vector.load %arg9[%c12_116, %c128_117] : memref<16x401xf32, #tpu.memory_space<vmem>>, vector<4x256xf32>
    tpu.vector_store %arg9[%c12_116, %c128_117], %156 {strides = array<i32>} : memref<16x401xf32, #tpu.memory_space<vmem>>, vector<4x256xf32>,
    %c0_118 = arith.constant 0 : index
    %c128_119 = arith.constant 128 : index
    %158 = vector.load %arg9[%c0_118, %c128_119] : memref<16x401xf32, #tpu.memory_space<vmem>>, vector<16x256xf32>
    %c0_120 = arith.constant 0 : index
    %c0_121 = arith.constant 0 : index
    %c0_122 = arith.constant 0 : index
    %159 = vector.load %arg8[%c0_120, %c0_121, %c0_122] : memref<2x16x256xf32, #tpu.memory_space<vmem>>, vector<1x16x256xf32>
    %160 = vector.shape_cast %159 : vector<1x16x256xf32> to vector<16x256xf32>
    %161 = vector.shape_cast %158 : vector<16x256xf32> to vector<1x16x256xf32>
    tpu.vector_store %arg8[%c0_120, %c0_121, %c0_122], %161 {strides = array<i32>} : memref<2x16x256xf32, #tpu.memory_space<vmem>>, vector<1x16x256xf32>,
    %c1 = arith.constant 1 : index
    %c0_123 = arith.constant 0 : index
    %c0_124 = arith.constant 0 : index
    %162 = vector.load %arg1[%c1, %c0_123, %c0_124] : memref<2x4x256xf32, #tpu.memory_space<vmem>>, vector<1x4x256xf32>
    %163 = vector.shape_cast %162 : vector<1x4x256xf32> to vector<4x256xf32>
    %c0_125 = arith.constant 0 : index
    %c128_126 = arith.constant 128 : index
    %164 = vector.load %arg9[%c0_125, %c128_126] : memref<16x401xf32, #tpu.memory_space<vmem>>, vector<4x256xf32>
    tpu.vector_store %arg9[%c0_125, %c128_126], %163 {strides = array<i32>} : memref<16x401xf32, #tpu.memory_space<vmem>>, vector<4x256xf32>,
    %c0_127 = arith.constant 0 : index
    %c111_128 = arith.constant 111 : index
    %165 = vector.load %arg9[%c0_127, %c111_128] : memref<16x401xf32, #tpu.memory_space<vmem>>, vector<4x256xf32>
    %166 = vector.broadcast %20 : vector<1x256xf32> to vector<4x256xf32>
    %167 = arith.mulf %165, %166 : vector<4x256xf32>
    %c0_129 = arith.constant 0 : index
    %c0_130 = arith.constant 0 : index
    %168 = vector.load %arg10[%c0_129, %c0_130] : memref<108x256xf32, #tpu.memory_space<vmem>>, vector<4x256xf32>
    tpu.vector_store %arg10[%c0_129, %c0_130], %167 {strides = array<i32>} : memref<108x256xf32, #tpu.memory_space<vmem>>, vector<4x256xf32>,
    %c0_131 = arith.constant 0 : index
    %c112_132 = arith.constant 112 : index
    %169 = vector.load %arg9[%c0_131, %c112_132] : memref<16x401xf32, #tpu.memory_space<vmem>>, vector<4x256xf32>
    %c4_133 = arith.constant 4 : index
    %c0_134 = arith.constant 0 : index
    %170 = vector.load %arg10[%c4_133, %c0_134] : memref<108x256xf32, #tpu.memory_space<vmem>>, vector<4x256xf32>
    tpu.vector_store %arg10[%c4_133, %c0_134], %169 {strides = array<i32>} : memref<108x256xf32, #tpu.memory_space<vmem>>, vector<4x256xf32>,
    %c0_135 = arith.constant 0 : index
    %c113_136 = arith.constant 113 : index
    %171 = vector.load %arg9[%c0_135, %c113_136] : memref<16x401xf32, #tpu.memory_space<vmem>>, vector<4x256xf32>
    %172 = vector.broadcast %24 : vector<1x256xf32> to vector<4x256xf32>
    %173 = arith.mulf %171, %172 : vector<4x256xf32>
    %c8_137 = arith.constant 8 : index
    %c0_138 = arith.constant 0 : index
    %174 = vector.load %arg10[%c8_137, %c0_138] : memref<108x256xf32, #tpu.memory_space<vmem>>, vector<4x256xf32>
    tpu.vector_store %arg10[%c8_137, %c0_138], %173 {strides = array<i32>} : memref<108x256xf32, #tpu.memory_space<vmem>>, vector<4x256xf32>,
    %c0_139 = arith.constant 0 : index
    %c127_140 = arith.constant 127 : index
    %175 = vector.load %arg9[%c0_139, %c127_140] : memref<16x401xf32, #tpu.memory_space<vmem>>, vector<4x256xf32>
    %176 = vector.broadcast %20 : vector<1x256xf32> to vector<4x256xf32>
    %177 = arith.mulf %175, %176 : vector<4x256xf32>
    %c12_141 = arith.constant 12 : index
    %c0_142 = arith.constant 0 : index
    %178 = vector.load %arg10[%c12_141, %c0_142] : memref<108x256xf32, #tpu.memory_space<vmem>>, vector<4x256xf32>
    tpu.vector_store %arg10[%c12_141, %c0_142], %177 {strides = array<i32>} : memref<108x256xf32, #tpu.memory_space<vmem>>, vector<4x256xf32>,
    %c0_143 = arith.constant 0 : index
    %c128_144 = arith.constant 128 : index
    %179 = vector.load %arg9[%c0_143, %c128_144] : memref<16x401xf32, #tpu.memory_space<vmem>>, vector<4x256xf32>
    %c16_145 = arith.constant 16 : index
    %c0_146 = arith.constant 0 : index
    %180 = vector.load %arg10[%c16_145, %c0_146] : memref<108x256xf32, #tpu.memory_space<vmem>>, vector<4x256xf32>
    tpu.vector_store %arg10[%c16_145, %c0_146], %179 {strides = array<i32>} : memref<108x256xf32, #tpu.memory_space<vmem>>, vector<4x256xf32>,
    %c0_147 = arith.constant 0 : index
    %c129_148 = arith.constant 129 : index
    %181 = vector.load %arg9[%c0_147, %c129_148] : memref<16x401xf32, #tpu.memory_space<vmem>>, vector<4x256xf32>
    %182 = vector.broadcast %24 : vector<1x256xf32> to vector<4x256xf32>
    %183 = arith.mulf %181, %182 : vector<4x256xf32>
    %c20_149 = arith.constant 20 : index
    %c0_150 = arith.constant 0 : index
    %184 = vector.load %arg10[%c20_149, %c0_150] : memref<108x256xf32, #tpu.memory_space<vmem>>, vector<4x256xf32>
    tpu.vector_store %arg10[%c20_149, %c0_150], %183 {strides = array<i32>} : memref<108x256xf32, #tpu.memory_space<vmem>>, vector<4x256xf32>,
    %c0_151 = arith.constant 0 : index
    %c143_152 = arith.constant 143 : index
    %185 = vector.load %arg9[%c0_151, %c143_152] : memref<16x401xf32, #tpu.memory_space<vmem>>, vector<4x256xf32>
    %186 = vector.broadcast %20 : vector<1x256xf32> to vector<4x256xf32>
    %187 = arith.mulf %185, %186 : vector<4x256xf32>
    %c24_153 = arith.constant 24 : index
    %c0_154 = arith.constant 0 : index
    %188 = vector.load %arg10[%c24_153, %c0_154] : memref<108x256xf32, #tpu.memory_space<vmem>>, vector<4x256xf32>
    tpu.vector_store %arg10[%c24_153, %c0_154], %187 {strides = array<i32>} : memref<108x256xf32, #tpu.memory_space<vmem>>, vector<4x256xf32>,
    %c0_155 = arith.constant 0 : index
    %c144_156 = arith.constant 144 : index
    %189 = vector.load %arg9[%c0_155, %c144_156] : memref<16x401xf32, #tpu.memory_space<vmem>>, vector<4x256xf32>
    %c28_157 = arith.constant 28 : index
    %c0_158 = arith.constant 0 : index
    %190 = vector.load %arg10[%c28_157, %c0_158] : memref<108x256xf32, #tpu.memory_space<vmem>>, vector<4x256xf32>
    tpu.vector_store %arg10[%c28_157, %c0_158], %189 {strides = array<i32>} : memref<108x256xf32, #tpu.memory_space<vmem>>, vector<4x256xf32>,
    %c0_159 = arith.constant 0 : index
    %c145_160 = arith.constant 145 : index
    %191 = vector.load %arg9[%c0_159, %c145_160] : memref<16x401xf32, #tpu.memory_space<vmem>>, vector<4x256xf32>
    %192 = vector.broadcast %24 : vector<1x256xf32> to vector<4x256xf32>
    %193 = arith.mulf %191, %192 : vector<4x256xf32>
    %c32_161 = arith.constant 32 : index
    %c0_162 = arith.constant 0 : index
    %194 = vector.load %arg10[%c32_161, %c0_162] : memref<108x256xf32, #tpu.memory_space<vmem>>, vector<4x256xf32>
    tpu.vector_store %arg10[%c32_161, %c0_162], %193 {strides = array<i32>} : memref<108x256xf32, #tpu.memory_space<vmem>>, vector<4x256xf32>,
    %c0_163 = arith.constant 0 : index
    %c0_164 = arith.constant 0 : index
    %195 = vector.load %arg2[%c0_163, %c0_164] : memref<4x36xf32, #tpu.memory_space<vmem>>, vector<4x36xf32>
    %c0_165 = arith.constant 0 : index
    %c0_166 = arith.constant 0 : index
    %196 = vector.load %arg3[%c0_165, %c0_166] : memref<4x1xf32, #tpu.memory_space<vmem>>, vector<4x1xf32>
    %c0_167 = arith.constant 0 : index
    %c0_168 = arith.constant 0 : index
    %197 = vector.load %arg10[%c0_167, %c0_168] : memref<108x256xf32, #tpu.memory_space<vmem>>, vector<36x256xf32>
    %cst_169 = arith.constant dense<0.000000e+00> : vector<4x256xf32>
    %198 = tpu.matmul %195, %197, %cst_169 {dimension_numbers = #tpu.dot_dimension_numbers<[1], [0], [0], [1], [0, 0, 1, 1], [], []>} : vector<4x36xf32>, vector<36x256xf32>, vector<4x256xf32> -> vector<4x256xf32>
    %199 = vector.broadcast %196 : vector<4x1xf32> to vector<4x256xf32>
    %200 = arith.addf %198, %199 : vector<4x256xf32>
    %cst_170 = arith.constant 0.000000e+00 : f32
    %201 = vector.broadcast %cst_170 : f32 to vector<4x256xf32>
    %202 = arith.cmpf ogt, %200, %201 : vector<4x256xf32>
    %cst_171 = arith.constant 2.000000e-01 : f32
    %203 = vector.broadcast %cst_171 : f32 to vector<4x256xf32>
    %204 = arith.mulf %203, %200 : vector<4x256xf32>
    %205 = arith.select %202, %200, %204 : vector<4x256xi1>, vector<4x256xf32>
    %c4_172 = arith.constant 4 : index
    %c128_173 = arith.constant 128 : index
    %206 = vector.load %arg9[%c4_172, %c128_173] : memref<16x401xf32, #tpu.memory_space<vmem>>, vector<4x256xf32>
    tpu.vector_store %arg9[%c4_172, %c128_173], %205 {strides = array<i32>} : memref<16x401xf32, #tpu.memory_space<vmem>>, vector<4x256xf32>,
    %c4_174 = arith.constant 4 : index
    %c111_175 = arith.constant 111 : index
    %207 = vector.load %arg9[%c4_174, %c111_175] : memref<16x401xf32, #tpu.memory_space<vmem>>, vector<4x256xf32>
    %208 = vector.broadcast %20 : vector<1x256xf32> to vector<4x256xf32>
    %209 = arith.mulf %207, %208 : vector<4x256xf32>
    %c36_176 = arith.constant 36 : index
    %c0_177 = arith.constant 0 : index
    %210 = vector.load %arg10[%c36_176, %c0_177] : memref<108x256xf32, #tpu.memory_space<vmem>>, vector<4x256xf32>
    tpu.vector_store %arg10[%c36_176, %c0_177], %209 {strides = array<i32>} : memref<108x256xf32, #tpu.memory_space<vmem>>, vector<4x256xf32>,
    %c4_178 = arith.constant 4 : index
    %c112_179 = arith.constant 112 : index
    %211 = vector.load %arg9[%c4_178, %c112_179] : memref<16x401xf32, #tpu.memory_space<vmem>>, vector<4x256xf32>
    %c40_180 = arith.constant 40 : index
    %c0_181 = arith.constant 0 : index
    %212 = vector.load %arg10[%c40_180, %c0_181] : memref<108x256xf32, #tpu.memory_space<vmem>>, vector<4x256xf32>
    tpu.vector_store %arg10[%c40_180, %c0_181], %211 {strides = array<i32>} : memref<108x256xf32, #tpu.memory_space<vmem>>, vector<4x256xf32>,
    %c4_182 = arith.constant 4 : index
    %c113_183 = arith.constant 113 : index
    %213 = vector.load %arg9[%c4_182, %c113_183] : memref<16x401xf32, #tpu.memory_space<vmem>>, vector<4x256xf32>
    %214 = vector.broadcast %24 : vector<1x256xf32> to vector<4x256xf32>
    %215 = arith.mulf %213, %214 : vector<4x256xf32>
    %c44_184 = arith.constant 44 : index
    %c0_185 = arith.constant 0 : index
    %216 = vector.load %arg10[%c44_184, %c0_185] : memref<108x256xf32, #tpu.memory_space<vmem>>, vector<4x256xf32>
    tpu.vector_store %arg10[%c44_184, %c0_185], %215 {strides = array<i32>} : memref<108x256xf32, #tpu.memory_space<vmem>>, vector<4x256xf32>,
    %c4_186 = arith.constant 4 : index
    %c127_187 = arith.constant 127 : index
    %217 = vector.load %arg9[%c4_186, %c127_187] : memref<16x401xf32, #tpu.memory_space<vmem>>, vector<4x256xf32>
    %218 = vector.broadcast %20 : vector<1x256xf32> to vector<4x256xf32>
    %219 = arith.mulf %217, %218 : vector<4x256xf32>
    %c48_188 = arith.constant 48 : index
    %c0_189 = arith.constant 0 : index
    %220 = vector.load %arg10[%c48_188, %c0_189] : memref<108x256xf32, #tpu.memory_space<vmem>>, vector<4x256xf32>
    tpu.vector_store %arg10[%c48_188, %c0_189], %219 {strides = array<i32>} : memref<108x256xf32, #tpu.memory_space<vmem>>, vector<4x256xf32>,
    %c4_190 = arith.constant 4 : index
    %c128_191 = arith.constant 128 : index
    %221 = vector.load %arg9[%c4_190, %c128_191] : memref<16x401xf32, #tpu.memory_space<vmem>>, vector<4x256xf32>
    %c52_192 = arith.constant 52 : index
    %c0_193 = arith.constant 0 : index
    %222 = vector.load %arg10[%c52_192, %c0_193] : memref<108x256xf32, #tpu.memory_space<vmem>>, vector<4x256xf32>
    tpu.vector_store %arg10[%c52_192, %c0_193], %221 {strides = array<i32>} : memref<108x256xf32, #tpu.memory_space<vmem>>, vector<4x256xf32>,
    %c4_194 = arith.constant 4 : index
    %c129_195 = arith.constant 129 : index
    %223 = vector.load %arg9[%c4_194, %c129_195] : memref<16x401xf32, #tpu.memory_space<vmem>>, vector<4x256xf32>
    %224 = vector.broadcast %24 : vector<1x256xf32> to vector<4x256xf32>
    %225 = arith.mulf %223, %224 : vector<4x256xf32>
    %c56_196 = arith.constant 56 : index
    %c0_197 = arith.constant 0 : index
    %226 = vector.load %arg10[%c56_196, %c0_197] : memref<108x256xf32, #tpu.memory_space<vmem>>, vector<4x256xf32>
    tpu.vector_store %arg10[%c56_196, %c0_197], %225 {strides = array<i32>} : memref<108x256xf32, #tpu.memory_space<vmem>>, vector<4x256xf32>,
    %c4_198 = arith.constant 4 : index
    %c143_199 = arith.constant 143 : index
    %227 = vector.load %arg9[%c4_198, %c143_199] : memref<16x401xf32, #tpu.memory_space<vmem>>, vector<4x256xf32>
    %228 = vector.broadcast %20 : vector<1x256xf32> to vector<4x256xf32>
    %229 = arith.mulf %227, %228 : vector<4x256xf32>
    %c60_200 = arith.constant 60 : index
    %c0_201 = arith.constant 0 : index
    %230 = vector.load %arg10[%c60_200, %c0_201] : memref<108x256xf32, #tpu.memory_space<vmem>>, vector<4x256xf32>
    tpu.vector_store %arg10[%c60_200, %c0_201], %229 {strides = array<i32>} : memref<108x256xf32, #tpu.memory_space<vmem>>, vector<4x256xf32>,
    %c4_202 = arith.constant 4 : index
    %c144_203 = arith.constant 144 : index
    %231 = vector.load %arg9[%c4_202, %c144_203] : memref<16x401xf32, #tpu.memory_space<vmem>>, vector<4x256xf32>
    %c64_204 = arith.constant 64 : index
    %c0_205 = arith.constant 0 : index
    %232 = vector.load %arg10[%c64_204, %c0_205] : memref<108x256xf32, #tpu.memory_space<vmem>>, vector<4x256xf32>
    tpu.vector_store %arg10[%c64_204, %c0_205], %231 {strides = array<i32>} : memref<108x256xf32, #tpu.memory_space<vmem>>, vector<4x256xf32>,
    %c4_206 = arith.constant 4 : index
    %c145_207 = arith.constant 145 : index
    %233 = vector.load %arg9[%c4_206, %c145_207] : memref<16x401xf32, #tpu.memory_space<vmem>>, vector<4x256xf32>
    %234 = vector.broadcast %24 : vector<1x256xf32> to vector<4x256xf32>
    %235 = arith.mulf %233, %234 : vector<4x256xf32>
    %c68_208 = arith.constant 68 : index
    %c0_209 = arith.constant 0 : index
    %236 = vector.load %arg10[%c68_208, %c0_209] : memref<108x256xf32, #tpu.memory_space<vmem>>, vector<4x256xf32>
    tpu.vector_store %arg10[%c68_208, %c0_209], %235 {strides = array<i32>} : memref<108x256xf32, #tpu.memory_space<vmem>>, vector<4x256xf32>,
    %c0_210 = arith.constant 0 : index
    %c0_211 = arith.constant 0 : index
    %237 = vector.load %arg4[%c0_210, %c0_211] : memref<4x72xf32, #tpu.memory_space<vmem>>, vector<4x72xf32>
    %c0_212 = arith.constant 0 : index
    %c0_213 = arith.constant 0 : index
    %238 = vector.load %arg5[%c0_212, %c0_213] : memref<4x1xf32, #tpu.memory_space<vmem>>, vector<4x1xf32>
    %c0_214 = arith.constant 0 : index
    %c0_215 = arith.constant 0 : index
    %239 = vector.load %arg10[%c0_214, %c0_215] : memref<108x256xf32, #tpu.memory_space<vmem>>, vector<72x256xf32>
    %cst_216 = arith.constant dense<0.000000e+00> : vector<4x256xf32>
    %240 = tpu.matmul %237, %239, %cst_216 {dimension_numbers = #tpu.dot_dimension_numbers<[1], [0], [0], [1], [0, 0, 1, 1], [], []>} : vector<4x72xf32>, vector<72x256xf32>, vector<4x256xf32> -> vector<4x256xf32>
    %241 = vector.broadcast %238 : vector<4x1xf32> to vector<4x256xf32>
    %242 = arith.addf %240, %241 : vector<4x256xf32>
    %cst_217 = arith.constant 0.000000e+00 : f32
    %243 = vector.broadcast %cst_217 : f32 to vector<4x256xf32>
    %244 = arith.cmpf ogt, %242, %243 : vector<4x256xf32>
    %cst_218 = arith.constant 2.000000e-01 : f32
    %245 = vector.broadcast %cst_218 : f32 to vector<4x256xf32>
    %246 = arith.mulf %245, %242 : vector<4x256xf32>
    %247 = arith.select %244, %242, %246 : vector<4x256xi1>, vector<4x256xf32>
    %c8_219 = arith.constant 8 : index
    %c128_220 = arith.constant 128 : index
    %248 = vector.load %arg9[%c8_219, %c128_220] : memref<16x401xf32, #tpu.memory_space<vmem>>, vector<4x256xf32>
    tpu.vector_store %arg9[%c8_219, %c128_220], %247 {strides = array<i32>} : memref<16x401xf32, #tpu.memory_space<vmem>>, vector<4x256xf32>,
    %c8_221 = arith.constant 8 : index
    %c111_222 = arith.constant 111 : index
    %249 = vector.load %arg9[%c8_221, %c111_222] : memref<16x401xf32, #tpu.memory_space<vmem>>, vector<4x256xf32>
    %250 = vector.broadcast %20 : vector<1x256xf32> to vector<4x256xf32>
    %251 = arith.mulf %249, %250 : vector<4x256xf32>
    %c72_223 = arith.constant 72 : index
    %c0_224 = arith.constant 0 : index
    %252 = vector.load %arg10[%c72_223, %c0_224] : memref<108x256xf32, #tpu.memory_space<vmem>>, vector<4x256xf32>
    tpu.vector_store %arg10[%c72_223, %c0_224], %251 {strides = array<i32>} : memref<108x256xf32, #tpu.memory_space<vmem>>, vector<4x256xf32>,
    %c8_225 = arith.constant 8 : index
    %c112_226 = arith.constant 112 : index
    %253 = vector.load %arg9[%c8_225, %c112_226] : memref<16x401xf32, #tpu.memory_space<vmem>>, vector<4x256xf32>
    %c76_227 = arith.constant 76 : index
    %c0_228 = arith.constant 0 : index
    %254 = vector.load %arg10[%c76_227, %c0_228] : memref<108x256xf32, #tpu.memory_space<vmem>>, vector<4x256xf32>
    tpu.vector_store %arg10[%c76_227, %c0_228], %253 {strides = array<i32>} : memref<108x256xf32, #tpu.memory_space<vmem>>, vector<4x256xf32>,
    %c8_229 = arith.constant 8 : index
    %c113_230 = arith.constant 113 : index
    %255 = vector.load %arg9[%c8_229, %c113_230] : memref<16x401xf32, #tpu.memory_space<vmem>>, vector<4x256xf32>
    %256 = vector.broadcast %24 : vector<1x256xf32> to vector<4x256xf32>
    %257 = arith.mulf %255, %256 : vector<4x256xf32>
    %c80_231 = arith.constant 80 : index
    %c0_232 = arith.constant 0 : index
    %258 = vector.load %arg10[%c80_231, %c0_232] : memref<108x256xf32, #tpu.memory_space<vmem>>, vector<4x256xf32>
    tpu.vector_store %arg10[%c80_231, %c0_232], %257 {strides = array<i32>} : memref<108x256xf32, #tpu.memory_space<vmem>>, vector<4x256xf32>,
    %c8_233 = arith.constant 8 : index
    %c127_234 = arith.constant 127 : index
    %259 = vector.load %arg9[%c8_233, %c127_234] : memref<16x401xf32, #tpu.memory_space<vmem>>, vector<4x256xf32>
    %260 = vector.broadcast %20 : vector<1x256xf32> to vector<4x256xf32>
    %261 = arith.mulf %259, %260 : vector<4x256xf32>
    %c84_235 = arith.constant 84 : index
    %c0_236 = arith.constant 0 : index
    %262 = vector.load %arg10[%c84_235, %c0_236] : memref<108x256xf32, #tpu.memory_space<vmem>>, vector<4x256xf32>
    tpu.vector_store %arg10[%c84_235, %c0_236], %261 {strides = array<i32>} : memref<108x256xf32, #tpu.memory_space<vmem>>, vector<4x256xf32>,
    %c8_237 = arith.constant 8 : index
    %c128_238 = arith.constant 128 : index
    %263 = vector.load %arg9[%c8_237, %c128_238] : memref<16x401xf32, #tpu.memory_space<vmem>>, vector<4x256xf32>
    %c88_239 = arith.constant 88 : index
    %c0_240 = arith.constant 0 : index
    %264 = vector.load %arg10[%c88_239, %c0_240] : memref<108x256xf32, #tpu.memory_space<vmem>>, vector<4x256xf32>
    tpu.vector_store %arg10[%c88_239, %c0_240], %263 {strides = array<i32>} : memref<108x256xf32, #tpu.memory_space<vmem>>, vector<4x256xf32>,
    %c8_241 = arith.constant 8 : index
    %c129_242 = arith.constant 129 : index
    %265 = vector.load %arg9[%c8_241, %c129_242] : memref<16x401xf32, #tpu.memory_space<vmem>>, vector<4x256xf32>
    %266 = vector.broadcast %24 : vector<1x256xf32> to vector<4x256xf32>
    %267 = arith.mulf %265, %266 : vector<4x256xf32>
    %c92_243 = arith.constant 92 : index
    %c0_244 = arith.constant 0 : index
    %268 = vector.load %arg10[%c92_243, %c0_244] : memref<108x256xf32, #tpu.memory_space<vmem>>, vector<4x256xf32>
    tpu.vector_store %arg10[%c92_243, %c0_244], %267 {strides = array<i32>} : memref<108x256xf32, #tpu.memory_space<vmem>>, vector<4x256xf32>,
    %c8_245 = arith.constant 8 : index
    %c143_246 = arith.constant 143 : index
    %269 = vector.load %arg9[%c8_245, %c143_246] : memref<16x401xf32, #tpu.memory_space<vmem>>, vector<4x256xf32>
    %270 = vector.broadcast %20 : vector<1x256xf32> to vector<4x256xf32>
    %271 = arith.mulf %269, %270 : vector<4x256xf32>
    %c96_247 = arith.constant 96 : index
    %c0_248 = arith.constant 0 : index
    %272 = vector.load %arg10[%c96_247, %c0_248] : memref<108x256xf32, #tpu.memory_space<vmem>>, vector<4x256xf32>
    tpu.vector_store %arg10[%c96_247, %c0_248], %271 {strides = array<i32>} : memref<108x256xf32, #tpu.memory_space<vmem>>, vector<4x256xf32>,
    %c8_249 = arith.constant 8 : index
    %c144_250 = arith.constant 144 : index
    %273 = vector.load %arg9[%c8_249, %c144_250] : memref<16x401xf32, #tpu.memory_space<vmem>>, vector<4x256xf32>
    %c100_251 = arith.constant 100 : index
    %c0_252 = arith.constant 0 : index
    %274 = vector.load %arg10[%c100_251, %c0_252] : memref<108x256xf32, #tpu.memory_space<vmem>>, vector<4x256xf32>
    tpu.vector_store %arg10[%c100_251, %c0_252], %273 {strides = array<i32>} : memref<108x256xf32, #tpu.memory_space<vmem>>, vector<4x256xf32>,
    %c8_253 = arith.constant 8 : index
    %c145_254 = arith.constant 145 : index
    %275 = vector.load %arg9[%c8_253, %c145_254] : memref<16x401xf32, #tpu.memory_space<vmem>>, vector<4x256xf32>
    %276 = vector.broadcast %24 : vector<1x256xf32> to vector<4x256xf32>
    %277 = arith.mulf %275, %276 : vector<4x256xf32>
    %c104_255 = arith.constant 104 : index
    %c0_256 = arith.constant 0 : index
    %278 = vector.load %arg10[%c104_255, %c0_256] : memref<108x256xf32, #tpu.memory_space<vmem>>, vector<4x256xf32>
    tpu.vector_store %arg10[%c104_255, %c0_256], %277 {strides = array<i32>} : memref<108x256xf32, #tpu.memory_space<vmem>>, vector<4x256xf32>,
    %c0_257 = arith.constant 0 : index
    %c0_258 = arith.constant 0 : index
    %279 = vector.load %arg6[%c0_257, %c0_258] : memref<4x108xf32, #tpu.memory_space<vmem>>, vector<4x108xf32>
    %c0_259 = arith.constant 0 : index
    %c0_260 = arith.constant 0 : index
    %280 = vector.load %arg7[%c0_259, %c0_260] : memref<4x1xf32, #tpu.memory_space<vmem>>, vector<4x1xf32>
    %c0_261 = arith.constant 0 : index
    %c0_262 = arith.constant 0 : index
    %281 = vector.load %arg10[%c0_261, %c0_262] : memref<108x256xf32, #tpu.memory_space<vmem>>, vector<108x256xf32>
    %cst_263 = arith.constant dense<0.000000e+00> : vector<4x256xf32>
    %282 = tpu.matmul %279, %281, %cst_263 {dimension_numbers = #tpu.dot_dimension_numbers<[1], [0], [0], [1], [0, 0, 1, 1], [], []>} : vector<4x108xf32>, vector<108x256xf32>, vector<4x256xf32> -> vector<4x256xf32>
    %283 = vector.broadcast %280 : vector<4x1xf32> to vector<4x256xf32>
    %284 = arith.addf %282, %283 : vector<4x256xf32>
    %cst_264 = arith.constant 0.000000e+00 : f32
    %285 = vector.broadcast %cst_264 : f32 to vector<4x256xf32>
    %286 = arith.cmpf ogt, %284, %285 : vector<4x256xf32>
    %cst_265 = arith.constant 2.000000e-01 : f32
    %287 = vector.broadcast %cst_265 : f32 to vector<4x256xf32>
    %288 = arith.mulf %287, %284 : vector<4x256xf32>
    %289 = arith.select %286, %284, %288 : vector<4x256xi1>, vector<4x256xf32>
    %c12_266 = arith.constant 12 : index
    %c128_267 = arith.constant 128 : index
    %290 = vector.load %arg9[%c12_266, %c128_267] : memref<16x401xf32, #tpu.memory_space<vmem>>, vector<4x256xf32>
    tpu.vector_store %arg9[%c12_266, %c128_267], %289 {strides = array<i32>} : memref<16x401xf32, #tpu.memory_space<vmem>>, vector<4x256xf32>,
    %c0_268 = arith.constant 0 : index
    %c128_269 = arith.constant 128 : index
    %291 = vector.load %arg9[%c0_268, %c128_269] : memref<16x401xf32, #tpu.memory_space<vmem>>, vector<16x256xf32>
    %c1_270 = arith.constant 1 : index
    %c0_271 = arith.constant 0 : index
    %c0_272 = arith.constant 0 : index
    %292 = vector.load %arg8[%c1_270, %c0_271, %c0_272] : memref<2x16x256xf32, #tpu.memory_space<vmem>>, vector<1x16x256xf32>
    %293 = vector.shape_cast %292 : vector<1x16x256xf32> to vector<16x256xf32>
    %294 = vector.shape_cast %291 : vector<16x256xf32> to vector<1x16x256xf32>
    tpu.vector_store %arg8[%c1_270, %c0_271, %c0_272], %294 {strides = array<i32>} : memref<2x16x256xf32, #tpu.memory_space<vmem>>, vector<1x16x256xf32>,
    return
  }
  func.func @transform_0(%arg0: i32) -> (i32, i32, i32) {
    %c0_i32 = arith.constant 0 : i32
    %c0_i32_0 = arith.constant 0 : i32
    %c0_i32_1 = arith.constant 0 : i32
    return %arg0, %c0_i32, %c0_i32_0 : i32, i32, i32
  }
  func.func @transform_1(%arg0: i32) -> (i32, i32) {
    %c0_i32 = arith.constant 0 : i32
    %c0_i32_0 = arith.constant 0 : i32
    %c0_i32_1 = arith.constant 0 : i32
    return %c0_i32, %c0_i32_0 : i32, i32
  }
  func.func @transform_2(%arg0: i32) -> (i32, i32) {
    %c0_i32 = arith.constant 0 : i32
    %c0_i32_0 = arith.constant 0 : i32
    %c0_i32_1 = arith.constant 0 : i32
    return %c0_i32, %c0_i32_0 : i32, i32
  }
  func.func @transform_3(%arg0: i32) -> (i32, i32) {
    %c0_i32 = arith.constant 0 : i32
    %c0_i32_0 = arith.constant 0 : i32
    %c0_i32_1 = arith.constant 0 : i32
    return %c0_i32, %c0_i32_0 : i32, i32
  }
  func.func @transform_4(%arg0: i32) -> (i32, i32) {
    %c0_i32 = arith.constant 0 : i32
    %c0_i32_0 = arith.constant 0 : i32
    %c0_i32_1 = arith.constant 0 : i32
    return %c0_i32, %c0_i32_0 : i32, i32
  }
  func.func @transform_5(%arg0: i32) -> (i32, i32) {
    %c0_i32 = arith.constant 0 : i32
    %c0_i32_0 = arith.constant 0 : i32
    %c0_i32_1 = arith.constant 0 : i32
    return %c0_i32, %c0_i32_0 : i32, i32
  }
  func.func @transform_6(%arg0: i32) -> (i32, i32) {
    %c0_i32 = arith.constant 0 : i32
    %c0_i32_0 = arith.constant 0 : i32
    %c0_i32_1 = arith.constant 0 : i32
    return %c0_i32, %c0_i32_0 : i32, i32
  }
  func.func @transform_7(%arg0: i32) -> (i32, i32, i32) {
    %c0_i32 = arith.constant 0 : i32
    %c0_i32_0 = arith.constant 0 : i32
    %c0_i32_1 = arith.constant 0 : i32
    return %arg0, %c0_i32, %c0_i32_0 : i32, i32, i32
  }
}

</mosaic_0001>

<llo_original>
// kernel: tpu_custom_call.1
$region0: #{tpu_custom_call.1}
  #allocation0 [shape = 'u32[]', space=smem, size = 0x4, offset = 0x4, fixed_abs, tag = 'smem constant byte address 0x4 - core index']
  #allocation1 [shape = 'u32[72,128]{1,0:T(1,128)}', space=vmem, size = 0x9000, scoped, tag = 'internal scratch']
  #allocation2 [shape = 'f32[16,401]{1,0:T(8,128)}', space=vmem, size = 0x8000, scoped, tag = 'scratch operand']
  #allocation3 [shape = 'f32[108,256]{1,0:T(8,128)}', space=vmem, size = 0x1c000, scoped, tag = 'scratch operand']
  %s0 = inlined_call_operand.hbm [shape: f32[2,4,256], index: 0, kind: input, shape index: {}]
  %s1 = inlined_call_operand.vmem [shape: f32[4,36], index: 1, kind: input, shape index: {}]
  %s2 = inlined_call_operand.vmem [shape: f32[4,1], index: 2, kind: input, shape index: {}]
  %s3 = inlined_call_operand.vmem [shape: f32[4,72], index: 3, kind: input, shape index: {}]
  %s4 = inlined_call_operand.vmem [shape: f32[4,1], index: 4, kind: input, shape index: {}]
  %s5 = inlined_call_operand.vmem [shape: f32[4,108], index: 5, kind: input, shape index: {}]
  %s6 = inlined_call_operand.vmem [shape: f32[4,1], index: 6, kind: input, shape index: {}]
  %s7 = inlined_call_operand.hbm [shape: f32[2,16,256], index: 7, kind: output, shape index: {}]
  %s8 = sld [smem:[#allocation0]]
  $region42: #{tpu_custom_call.1} parent=0
    _
  %s10 = ssub.s32 1, %s8
  %s11 = scalar_select 0, %s10, %s8
  $region1: #{tpu_custom_call.1} parent=0
    #allocation4 [shape = 'u8[8192]{0}', space=vmem, size = 0x2000, scoped, tag = 'input window, operand 0, single buffered']
    #allocation5 [shape = 's32[1]{0}', space=sflag, size = 0x4, scoped, tag = 'scoped memory for tpu_custom_call.1']
    #allocation6 [shape = 's32[1]{0}', space=sflag, size = 0x4, scoped, tag = 'scoped memory for tpu_custom_call.1']
    #allocation7 [shape = 'u8[32768]{0}', space=vmem, size = 0x8000, scoped, tag = 'output window, operand 0, single buffered']
    %12 = vsyncpa [#allocation5], 0
    %13 = vsyncpa [#allocation6], 0
    // Predicated region
    $region2: #{tpu_custom_call.1} parent=1 // pred_check
      _
    $region3: #{tpu_custom_call.1} parent=1 // pred_check_branch
      %15 = sbr.rel (0) target = $region5
    $region4: #{tpu_custom_call.1} parent=1 // pred_region
      %17 = vsyncadd [#allocation5], 0
      %s18 = sshll.u32 %s0, 4
      %s19 = int_to_ptr.hbm [resolvable:$true] %s18
      %s20 = sshll.u32 [#allocation4], 4
      %s21 = int_to_ptr.vmem [resolvable:$true] %s20
      %26 = dma.hbm_to_vmem [thread:$0]  %s19, 256, %s21, [#allocation5], 128, 128, 8
    $region5: #{tpu_custom_call.1} parent=1 // pred_fallthru
      _
    // Predicated region
    $region6: #{tpu_custom_call.1} parent=1 // pred_check
      _
    $region7: #{tpu_custom_call.1} parent=1 // pred_check_branch
      %28 = sbr.rel (0) target = $region9
    $region8: #{tpu_custom_call.1} parent=1 // pred_region
      _
    $region9: #{tpu_custom_call.1} parent=1 // pred_fallthru
      _
    // Predicated region
    $region10: #{tpu_custom_call.1} parent=1 // pred_check
      _
    $region11: #{tpu_custom_call.1} parent=1 // pred_check_branch
      %30 = sbr.rel (0) target = $region13
    $region12: #{tpu_custom_call.1} parent=1 // pred_region
      _
    $region13: #{tpu_custom_call.1} parent=1 // pred_fallthru
      _
    // Predicated region
    $region14: #{tpu_custom_call.1} parent=1 // pred_check
      _
    $region15: #{tpu_custom_call.1} parent=1 // pred_check_branch
      %32 = sbr.rel (0) target = $region17
    $region16: #{tpu_custom_call.1} parent=1 // pred_region
      _
    $region17: #{tpu_custom_call.1} parent=1 // pred_fallthru
      _
    // Predicated region
    $region18: #{tpu_custom_call.1} parent=1 // pred_check
      _
    $region19: #{tpu_custom_call.1} parent=1 // pred_check_branch
      %34 = sbr.rel (0) target = $region21
    $region20: #{tpu_custom_call.1} parent=1 // pred_region
      _
    $region21: #{tpu_custom_call.1} parent=1 // pred_fallthru
      _
    // Predicated region
    $region22: #{tpu_custom_call.1} parent=1 // pred_check
      _
    $region23: #{tpu_custom_call.1} parent=1 // pred_check_branch
      %36 = sbr.rel (0) target = $region25
    $region24: #{tpu_custom_call.1} parent=1 // pred_region
      _
    $region25: #{tpu_custom_call.1} parent=1 // pred_fallthru
      _
    // Predicated region
    $region26: #{tpu_custom_call.1} parent=1 // pred_check
      _
    $region27: #{tpu_custom_call.1} parent=1 // pred_check_branch
      %38 = sbr.rel (0) target = $region29
    $region28: #{tpu_custom_call.1} parent=1 // pred_region
      _
    $region29: #{tpu_custom_call.1} parent=1 // pred_fallthru
      _
    // Predicated region
    $region30: #{tpu_custom_call.1} parent=1 // pred_check
      _
    $region31: #{tpu_custom_call.1} parent=1 // pred_check_branch
      %40 = sbr.rel (0) target = $region33
    $region32: #{tpu_custom_call.1} parent=1 // pred_region
      %42 = dma.done [#allocation5], 256
    $region33: #{tpu_custom_call.1} parent=1 // pred_fallthru
      _
    %v43 = vlaneseq
    %v44 = vand.u32 %v43, 127
    %v45 = vadd.s32 %v44, 128
    %vm46 = vcmp.lt.s32.totalorder %v44, 0
    %v47 = vsub.s32 0, %v44
    %v48 = vsel %vm46, %v47, %v44
    %v49 = vshrl.u32 %v48, 4
    %v50 = vand.u32 %v48, 15
    %v51 = vsub.s32 0, %v50
    %v52 = vsel %vm46, %v51, %v50
    %vm53 = vcmp.lt.s32.totalorder %v45, 0
    %v54 = vsub.s32 0, %v45
    %v55 = vsel %vm53, %v54, %v45
    %v56 = vshrl.u32 %v55, 4
    %v57 = vand.u32 %v55, 15
    %v58 = vsub.s32 0, %v57
    %v59 = vsel %vm53, %v58, %v57
    %vm60 = vcmp.ne.s32.totalorder %v52, 0
    %vm61 = vcmp.ne.s32.totalorder %v59, 0
    %vm62 = vcmp.lt.s32.totalorder %v52, 0
    %vm63 = vcmp.lt.s32.totalorder %v59, 0
    %vm64 = vmand %vm62, %vm60
    %vm65 = vmand %vm63, %vm61
    %v66 = vadd.s32 %v52, 16
    %v67 = vadd.s32 %v59, 16
    %v68 = vsel %vm64, %v66, %v52
    %v69 = vsel %vm65, %v67, %v59
    %vm70 = vcmp.ne.s32.totalorder %v68, 0
    %vm71 = vcmp.ne.s32.totalorder %v69, 0
    %v72 = vsel %vm70, 1, 0
    %v73 = vsel %vm71, 1, 0
    %v74 = vcvt.s32.f32 %v72
    %v75 = vcvt.s32.f32 %v73
    %vm76 = vcmp.ne.s32.totalorder %v68, 15
    %vm77 = vcmp.ne.s32.totalorder %v69, 15
    %v78 = vsel %vm76, 1, 0
    %v79 = vsel %vm77, 1, 0
    %v80 = vcvt.s32.f32 %v78
    %v81 = vcvt.s32.f32 %v79
    %vm82 = vcmask 1048440
    %83 = vst.msk [vmem:[#allocation2] sm:$0xff] %vm82, 0.0
    %84 = vst.msk [vmem:[#allocation2 + $0x20] sm:$0xff] %vm82, 0.0
    %vm85 = vcmask 138240
    %86 = vst.msk [vmem:[#allocation2 + $0x18] sm:$0xff] %vm85, 0.0
    %87 = vst.msk [vmem:[#allocation2 + $0x38] sm:$0xff] %vm85, 0.0
    %v88 = vld [vmem:[#allocation4] sm:$0xff]
    %90 = vst [vmem:[#allocation1] ss:$2 sm:$0xff] %v88
    %v91 = vld.sshfl [vmem:[#allocation1] sm:$0xff pattern:$0x75316420]
    %v92 = vld.sshfl [vmem:[#allocation1 + $0x8] sm:$0xff pattern:$0x75316420]
    %95 = vst [vmem:[#allocation2 + $0x8] sm:$0xf] %v91
    %96 = vst [vmem:[#allocation2 + $0x10] sm:$0xf] %v92
    %v97 = vld [vmem:[#allocation2] sm:$0xf]
    %v98 = vld [vmem:[#allocation2 + $0x8] sm:$0xf]
    %v99 = vld [vmem:[#allocation2 + $0x10] sm:$0xf]
    %102 = vrot.lane.b32.xlu0 %v74, 111
    %v103 = vpop.permute.xlu0 %102
    %104 = vrot.lane.b32.xlu0 %v75, 111
    %v105 = vpop.permute.xlu0 %104
    %vm106 = vcmask 908288
    %v107 = vsel %vm106, %v103, %v105
    %v111 = vmul.f32 %v97, %v103
    %v112 = vmul.f32 %v98, %v107
    %v113 = vmul.f32 %v99, %v105
    %117 = vrot.lane.b32.xlu0 %v111, 17
    %v118 = vpop.permute.xlu0 %117
    %119 = vrot.lane.b32.xlu0 %v112, 17
    %v120 = vpop.permute.xlu0 %119
    %121 = vrot.lane.b32.xlu0 %v113, 17
    %v122 = vpop.permute.xlu0 %121
    %v123 = vsel %vm85, %v118, %v120
    %v124 = vsel %vm85, %v120, %v122
    %127 = vst [vmem:[#allocation3] sm:$0xf] %v123
    %128 = vst [vmem:[#allocation3 + $0x8] sm:$0xf] %v124
    %v129 = vld [vmem:[#allocation2] sm:$0xf]
    %v130 = vld [vmem:[#allocation2 + $0x8] sm:$0xf]
    %v131 = vld [vmem:[#allocation2 + $0x10] sm:$0xf]
    %v135 = vrot.slane %v129, 4
    %v136 = vrot.slane %v130, 4
    %v137 = vrot.slane %v131, 4
    %138 = vrot.lane.b32.xlu0 %v135, 16
    %v139 = vpop.permute.xlu0 %138
    %140 = vrot.lane.b32.xlu0 %v136, 16
    %v141 = vpop.permute.xlu0 %140
    %142 = vrot.lane.b32.xlu0 %v137, 16
    %v143 = vpop.permute.xlu0 %142
    %vm144 = vcmask 130048
    %v145 = vsel %vm144, %v139, %v141
    %v146 = vsel %vm144, %v141, %v143
    %149 = vst [vmem:[#allocation3] sm:$0xf0] %v145
    %150 = vst [vmem:[#allocation3 + $0x8] sm:$0xf0] %v146
    %v151 = vld [vmem:[#allocation2] sm:$0xf]
    %v152 = vld [vmem:[#allocation2 + $0x8] sm:$0xf]
    %v153 = vld [vmem:[#allocation2 + $0x10] sm:$0xf]
    %156 = vrot.lane.b32.xlu0 %v80, 113
    %v157 = vpop.permute.xlu0 %156
    %158 = vrot.lane.b32.xlu0 %v81, 113
    %v159 = vpop.permute.xlu0 %158
    %vm160 = vcmask 924672
    %v161 = vsel %vm160, %v157, %v159
    %v165 = vmul.f32 %v151, %v157
    %v166 = vmul.f32 %v152, %v161
    %v167 = vmul.f32 %v153, %v159
    %171 = vrot.lane.b32.xlu0 %v165, 15
    %v172 = vpop.permute.xlu0 %171
    %173 = vrot.lane.b32.xlu0 %v166, 15
    %v174 = vpop.permute.xlu0 %173
    %175 = vrot.lane.b32.xlu0 %v167, 15
    %v176 = vpop.permute.xlu0 %175
    %vm177 = vcmask 121856
    %v178 = vsel %vm177, %v172, %v174
    %v179 = vsel %vm177, %v174, %v176
    %182 = vst [vmem:[#allocation3 + $0x10] sm:$0xf] %v178
    %183 = vst [vmem:[#allocation3 + $0x18] sm:$0xf] %v179
    %v184 = vld [vmem:[#allocation2] sm:$0xf]
    %v185 = vld [vmem:[#allocation2 + $0x8] sm:$0xf]
    %v186 = vld [vmem:[#allocation2 + $0x10] sm:$0xf]
    %187 = vrot.lane.b32.xlu0 %v74, 127
    %v188 = vpop.permute.xlu0 %187
    %189 = vrot.lane.b32.xlu0 %v75, 127
    %v190 = vpop.permute.xlu0 %189
    %vm191 = vcmask 1039360
    %v192 = vsel %vm191, %v188, %v190
    %v196 = vmul.f32 %v184, %v188
    %v197 = vmul.f32 %v185, %v192
    %v198 = vmul.f32 %v186, %v190
    %v202 = vrot.slane %v196, 4
    %v203 = vrot.slane %v197, 4
    %v204 = vrot.slane %v198, 4
    %205 = vrot.lane.b32.xlu0 %v202, 1
    %v206 = vpop.permute.xlu0 %205
    %207 = vrot.lane.b32.xlu0 %v203, 1
    %v208 = vpop.permute.xlu0 %207
    %209 = vrot.lane.b32.xlu0 %v204, 1
    %v210 = vpop.permute.xlu0 %209
    %vm211 = vcmask 7168
    %v212 = vsel %vm211, %v206, %v208
    %v213 = vsel %vm211, %v208, %v210
    %216 = vst [vmem:[#allocation3 + $0x10] sm:$0xf0] %v212
    %217 = vst [vmem:[#allocation3 + $0x18] sm:$0xf0] %v213
    %v218 = vld [vmem:[#allocation2 + $0x8] sm:$0xf]
    %v219 = vld [vmem:[#allocation2 + $0x10] sm:$0xf]
    %220 = vst [vmem:[#allocation3 + $0x20] sm:$0xf] %v218
    %221 = vst [vmem:[#allocation3 + $0x28] sm:$0xf] %v219
    %v222 = vld [vmem:[#allocation2 + $0x8] sm:$0xf]
    %v223 = vld [vmem:[#allocation2 + $0x10] sm:$0xf]
    %v224 = vld [vmem:[#allocation2 + $0x18] sm:$0xf]
    %225 = vrot.lane.b32.xlu0 %v80, 1
    %v226 = vpop.permute.xlu0 %225
    %227 = vrot.lane.b32.xlu0 %v81, 1
    %v228 = vpop.permute.xlu0 %227
    %v229 = vsel %vm211, %v226, %v228
    %v233 = vmul.f32 %v222, %v226
    %v234 = vmul.f32 %v223, %v229
    %v235 = vmul.f32 %v224, %v228
    %v239 = vrot.slane %v233, 4
    %v240 = vrot.slane %v234, 4
    %v241 = vrot.slane %v235, 4
    %242 = vrot.lane.b32.xlu0 %v239, 127
    %v243 = vpop.permute.xlu0 %242
    %244 = vrot.lane.b32.xlu0 %v240, 127
    %v245 = vpop.permute.xlu0 %244
    %246 = vrot.lane.b32.xlu0 %v241, 127
    %v247 = vpop.permute.xlu0 %246
    %v248 = vsel %vm191, %v243, %v245
    %v249 = vsel %vm191, %v245, %v247
    %252 = vst [vmem:[#allocation3 + $0x20] sm:$0xf0] %v248
    %253 = vst [vmem:[#allocation3 + $0x28] sm:$0xf0] %v249
    %v254 = vld [vmem:[#allocation2 + $0x8] sm:$0xf]
    %v255 = vld [vmem:[#allocation2 + $0x10] sm:$0xf]
    %v256 = vld [vmem:[#allocation2 + $0x18] sm:$0xf]
    %257 = vrot.lane.b32.xlu0 %v74, 15
    %v258 = vpop.permute.xlu0 %257
    %259 = vrot.lane.b32.xlu0 %v75, 15
    %v260 = vpop.permute.xlu0 %259
    %v261 = vsel %vm177, %v258, %v260
    %v265 = vmul.f32 %v254, %v258
    %v266 = vmul.f32 %v255, %v261
    %v267 = vmul.f32 %v256, %v260
    %271 = vrot.lane.b32.xlu0 %v265, 113
    %v272 = vpop.permute.xlu0 %271
    %273 = vrot.lane.b32.xlu0 %v266, 113
    %v274 = vpop.permute.xlu0 %273
    %275 = vrot.lane.b32.xlu0 %v267, 113
    %v276 = vpop.permute.xlu0 %275
    %v277 = vsel %vm160, %v272, %v274
    %v278 = vsel %vm160, %v274, %v276
    %281 = vst [vmem:[#allocation3 + $0x30] sm:$0xf] %v277
    %282 = vst [vmem:[#allocation3 + $0x38] sm:$0xf] %v278
    %v283 = vld [vmem:[#allocation2 + $0x8] sm:$0xf]
    %v284 = vld [vmem:[#allocation2 + $0x10] sm:$0xf]
    %v285 = vld [vmem:[#allocation2 + $0x18] sm:$0xf]
    %v289 = vrot.slane %v283, 4
    %v290 = vrot.slane %v284, 4
    %v291 = vrot.slane %v285, 4
    %292 = vrot.lane.b32.xlu0 %v289, 112
    %v293 = vpop.permute.xlu0 %292
    %294 = vrot.lane.b32.xlu0 %v290, 112
    %v295 = vpop.permute.xlu0 %294
    %296 = vrot.lane.b32.xlu0 %v291, 112
    %v297 = vpop.permute.xlu0 %296
    %vm298 = vcmask 916480
    %v299 = vsel %vm298, %v293, %v295
    %v300 = vsel %vm298, %v295, %v297
    %303 = vst [vmem:[#allocation3 + $0x30] sm:$0xf0] %v299
    %304 = vst [vmem:[#allocation3 + $0x38] sm:$0xf0] %v300
    %v305 = vld [vmem:[#allocation2 + $0x8] sm:$0xf]
    %v306 = vld [vmem:[#allocation2 + $0x10] sm:$0xf]
    %v307 = vld [vmem:[#allocation2 + $0x18] sm:$0xf]
    %308 = vrot.lane.b32.xlu0 %v80, 17
    %v309 = vpop.permute.xlu0 %308
    %310 = vrot.lane.b32.xlu0 %v81, 17
    %v311 = vpop.permute.xlu0 %310
    %v312 = vsel %vm85, %v309, %v311
    %v316 = vmul.f32 %v305, %v309
    %v317 = vmul.f32 %v306, %v312
    %v318 = vmul.f32 %v307, %v311
    %322 = vrot.lane.b32.xlu0 %v316, 111
    %v323 = vpop.permute.xlu0 %322
    %324 = vrot.lane.b32.xlu0 %v317, 111
    %v325 = vpop.permute.xlu0 %324
    %326 = vrot.lane.b32.xlu0 %v318, 111
    %v327 = vpop.permute.xlu0 %326
    %v328 = vsel %vm106, %v323, %v325
    %v329 = vsel %vm106, %v325, %v327
    %332 = vst [vmem:[#allocation3 + $0x40] sm:$0xf] %v328
    %333 = vst [vmem:[#allocation3 + $0x48] sm:$0xf] %v329
    %v334 = vld [vmem:[%s1] sm:$0xf]
    %v335 = vld [vmem:[%s2] sm:$0xf]
    %v336 = vld [vmem:[#allocation3] sm:$0xff]
    %v337 = vld [vmem:[#allocation3 + $0x8] sm:$0xff]
    %v338 = vld [vmem:[#allocation3 + $0x10] sm:$0xff]
    %v339 = vld [vmem:[#allocation3 + $0x18] sm:$0xff]
    %v340 = vld [vmem:[#allocation3 + $0x20] sm:$0xff]
    %v341 = vld [vmem:[#allocation3 + $0x28] sm:$0xff]
    %v342 = vld [vmem:[#allocation3 + $0x30] sm:$0xff]
    %v343 = vld [vmem:[#allocation3 + $0x38] sm:$0xff]
    %v344 = vld [vmem:[#allocation3 + $0x40] sm:$0xf]
    %v345 = vld [vmem:[#allocation3 + $0x48] sm:$0xf]
    %347 = vset.pattern.permute.xlu0 0
    %348 = vperm.xlu0 %347, %v335
    %v349 = vpop.permute.xlu0 %348
    %vm351 = vcmask 293888
    %v353 = vsel %vm351, %v334, 0
    %vm355 = vcmask 1043456
    %v357 = vsel %vm355, %v344, 0
    %v360 = vsel %vm355, %v345, 0
    %362 = vmatpush.msra.mxu0 0.0
    %363 = vmatpush.msra.mxu0 0.0
    %364 = vmatpush.msra.mxu0 0.0
    %365 = vmatpush.msra.mxu0 0.0
    %366 = vmatpush.msra.mxu0 0.0
    %367 = vmatpush.msra.mxu0 0.0
    %368 = vmatpush.msra.mxu0 0.0
    %369 = vmatpush.msra.mxu0 0.0
    %370 = vmatpush.msra.mxu0 0.0
    %371 = vmatpush.msra.mxu0 0.0
    %372 = vmatpush.msra.mxu0 0.0
    %373 = vmatpush.msra.mxu0 %v357
    %374 = vmatpush.msra.mxu0 %v342
    %375 = vmatpush.msra.mxu0 %v340
    %376 = vmatpush.msra.mxu0 %v338
    %377 = vmatpush.msra.mxu0 %v336
    %378 = vmatmul.f32.gmra.mxu0 %v353
    %v379 = vpop.f32.mrf.mxu0
    %v380 = vadd.f32 %v349, %v379
    %381 = vdwg.mxu0
    %382 = vmatpush.msra.mxu0 0.0
    %383 = vmatpush.msra.mxu0 0.0
    %384 = vmatpush.msra.mxu0 0.0
    %385 = vmatpush.msra.mxu0 0.0
    %386 = vmatpush.msra.mxu0 0.0
    %387 = vmatpush.msra.mxu0 0.0
    %388 = vmatpush.msra.mxu0 0.0
    %389 = vmatpush.msra.mxu0 0.0
    %390 = vmatpush.msra.mxu0 0.0
    %391 = vmatpush.msra.mxu0 0.0
    %392 = vmatpush.msra.mxu0 0.0
    %393 = vmatpush.msra.mxu0 %v360
    %394 = vmatpush.msra.mxu0 %v343
    %395 = vmatpush.msra.mxu0 %v341
    %396 = vmatpush.msra.mxu0 %v339
    %397 = vmatpush.msra.mxu0 %v337
    %398 = vmatmul.f32.gmra.mxu0 %v353
    %v399 = vpop.f32.mrf.mxu0
    %v400 = vadd.f32 %v349, %v399
    %401 = vdwg.mxu0
    %vm402 = vcmp.gt.f32.partialorder %v380, 0.0
    %vm403 = vcmp.gt.f32.partialorder %v400, 0.0
    %v404 = vmul.f32 %v380, 0.2
    %v405 = vmul.f32 %v400, 0.2
    %v406 = vsel %vm402, %v380, %v404
    %v407 = vsel %vm403, %v400, %v405
    %v410 = vrot.slane %v406, 4
    %v411 = vrot.slane %v407, 4
    %414 = vst [vmem:[#allocation2 + $0x8] sm:$0xf0] %v410
    %415 = vst [vmem:[#allocation2 + $0x10] sm:$0xf0] %v411
    %v416 = vld [vmem:[#allocation2] sm:$0xf0]
    %v417 = vld [vmem:[#allocation2 + $0x8] sm:$0xf0]
    %v418 = vld [vmem:[#allocation2 + $0x10] sm:$0xf0]
    %v419 = vmul.f32 %v416, %v103
    %v420 = vmul.f32 %v417, %v107
    %v421 = vmul.f32 %v418, %v105
    %425 = vrot.lane.b32.xlu0 %v419, 17
    %v426 = vpop.permute.xlu0 %425
    %427 = vrot.lane.b32.xlu0 %v420, 17
    %v428 = vpop.permute.xlu0 %427
    %429 = vrot.lane.b32.xlu0 %v421, 17
    %v430 = vpop.permute.xlu0 %429
    %v431 = vsel %vm85, %v426, %v428
    %v432 = vsel %vm85, %v428, %v430
    %435 = vst [vmem:[#allocation3 + $0x40] sm:$0xf0] %v431
    %436 = vst [vmem:[#allocation3 + $0x48] sm:$0xf0] %v432
    %v437 = vld [vmem:[#allocation2] sm:$0xf0]
    %v438 = vld [vmem:[#allocation2 + $0x8] sm:$0xf0]
    %v439 = vld [vmem:[#allocation2 + $0x10] sm:$0xf0]
    %v443 = vrot.slane %v437, 4
    %v444 = vrot.slane %v438, 4
    %v445 = vrot.slane %v439, 4
    %446 = vrot.lane.b32.xlu0 %v443, 16
    %v447 = vpop.permute.xlu0 %446
    %448 = vrot.lane.b32.xlu0 %v444, 16
    %v449 = vpop.permute.xlu0 %448
    %450 = vrot.lane.b32.xlu0 %v445, 16
    %v451 = vpop.permute.xlu0 %450
    %v452 = vsel %vm144, %v447, %v449
    %v453 = vsel %vm144, %v449, %v451
    %456 = vst [vmem:[#allocation3 + $0x50] sm:$0xf] %v452
    %457 = vst [vmem:[#allocation3 + $0x58] sm:$0xf] %v453
    %v458 = vld [vmem:[#allocation2] sm:$0xf0]
    %v459 = vld [vmem:[#allocation2 + $0x8] sm:$0xf0]
    %v460 = vld [vmem:[#allocation2 + $0x10] sm:$0xf0]
    %v461 = vmul.f32 %v458, %v157
    %v462 = vmul.f32 %v459, %v161
    %v463 = vmul.f32 %v460, %v159
    %467 = vrot.lane.b32.xlu0 %v461, 15
    %v468 = vpop.permute.xlu0 %467
    %469 = vrot.lane.b32.xlu0 %v462, 15
    %v470 = vpop.permute.xlu0 %469
    %471 = vrot.lane.b32.xlu0 %v463, 15
    %v472 = vpop.permute.xlu0 %471
    %v473 = vsel %vm177, %v468, %v470
    %v474 = vsel %vm177, %v470, %v472
    %477 = vst [vmem:[#allocation3 + $0x50] sm:$0xf0] %v473
    %478 = vst [vmem:[#allocation3 + $0x58] sm:$0xf0] %v474
    %v479 = vld [vmem:[#allocation2] sm:$0xf0]
    %v480 = vld [vmem:[#allocation2 + $0x8] sm:$0xf0]
    %v481 = vld [vmem:[#allocation2 + $0x10] sm:$0xf0]
    %v482 = vmul.f32 %v479, %v188
    %v483 = vmul.f32 %v480, %v192
    %v484 = vmul.f32 %v481, %v190
    %v488 = vrot.slane %v482, 4
    %v489 = vrot.slane %v483, 4
    %v490 = vrot.slane %v484, 4
    %491 = vrot.lane.b32.xlu0 %v488, 1
    %v492 = vpop.permute.xlu0 %491
    %493 = vrot.lane.b32.xlu0 %v489, 1
    %v494 = vpop.permute.xlu0 %493
    %495 = vrot.lane.b32.xlu0 %v490, 1
    %v496 = vpop.permute.xlu0 %495
    %v497 = vsel %vm211, %v492, %v494
    %v498 = vsel %vm211, %v494, %v496
    %501 = vst [vmem:[#allocation3 + $0x60] sm:$0xf] %v497
    %502 = vst [vmem:[#allocation3 + $0x68] sm:$0xf] %v498
    %v503 = vld [vmem:[#allocation2 + $0x8] sm:$0xf0]
    %v504 = vld [vmem:[#allocation2 + $0x10] sm:$0xf0]
    %505 = vst [vmem:[#allocation3 + $0x60] sm:$0xf0] %v503
    %506 = vst [vmem:[#allocation3 + $0x68] sm:$0xf0] %v504
    %v507 = vld [vmem:[#allocation2 + $0x8] sm:$0xf0]
    %v508 = vld [vmem:[#allocation2 + $0x10] sm:$0xf0]
    %v509 = vld [vmem:[#allocation2 + $0x18] sm:$0xf0]
    %v510 = vmul.f32 %v507, %v226
    %v511 = vmul.f32 %v508, %v229
    %v512 = vmul.f32 %v509, %v228
    %v516 = vrot.slane %v510, 4
    %v517 = vrot.slane %v511, 4
    %v518 = vrot.slane %v512, 4
    %519 = vrot.lane.b32.xlu0 %v516, 127
    %v520 = vpop.permute.xlu0 %519
    %521 = vrot.lane.b32.xlu0 %v517, 127
    %v522 = vpop.permute.xlu0 %521
    %523 = vrot.lane.b32.xlu0 %v518, 127
    %v524 = vpop.permute.xlu0 %523
    %v525 = vsel %vm191, %v520, %v522
    %v526 = vsel %vm191, %v522, %v524
    %529 = vst [vmem:[#allocation3 + $0x70] sm:$0xf] %v525
    %530 = vst [vmem:[#allocation3 + $0x78] sm:$0xf] %v526
    %v531 = vld [vmem:[#allocation2 + $0x8] sm:$0xf0]
    %v532 = vld [vmem:[#allocation2 + $0x10] sm:$0xf0]
    %v533 = vld [vmem:[#allocation2 + $0x18] sm:$0xf0]
    %v534 = vmul.f32 %v531, %v258
    %v535 = vmul.f32 %v532, %v261
    %v536 = vmul.f32 %v533, %v260
    %540 = vrot.lane.b32.xlu0 %v534, 113
    %v541 = vpop.permute.xlu0 %540
    %542 = vrot.lane.b32.xlu0 %v535, 113
    %v543 = vpop.permute.xlu0 %542
    %544 = vrot.lane.b32.xlu0 %v536, 113
    %v545 = vpop.permute.xlu0 %544
    %v546 = vsel %vm160, %v541, %v543
    %v547 = vsel %vm160, %v543, %v545
    %550 = vst [vmem:[#allocation3 + $0x70] sm:$0xf0] %v546
    %551 = vst [vmem:[#allocation3 + $0x78] sm:$0xf0] %v547
    %v552 = vld [vmem:[#allocation2 + $0x8] sm:$0xf0]
    %v553 = vld [vmem:[#allocation2 + $0x10] sm:$0xf0]
    %v554 = vld [vmem:[#allocation2 + $0x18] sm:$0xf0]
    %v558 = vrot.slane %v552, 4
    %v559 = vrot.slane %v553, 4
    %v560 = vrot.slane %v554, 4
    %561 = vrot.lane.b32.xlu0 %v558, 112
    %v562 = vpop.permute.xlu0 %561
    %563 = vrot.lane.b32.xlu0 %v559, 112
    %v564 = vpop.permute.xlu0 %563
    %565 = vrot.lane.b32.xlu0 %v560, 112
    %v566 = vpop.permute.xlu0 %565
    %v567 = vsel %vm298, %v562, %v564
    %v568 = vsel %vm298, %v564, %v566
    %571 = vst [vmem:[#allocation3 + $0x80] sm:$0xf] %v567
    %572 = vst [vmem:[#allocation3 + $0x88] sm:$0xf] %v568
    %v573 = vld [vmem:[#allocation2 + $0x8] sm:$0xf0]
    %v574 = vld [vmem:[#allocation2 + $0x10] sm:$0xf0]
    %v575 = vld [vmem:[#allocation2 + $0x18] sm:$0xf0]
    %v576 = vmul.f32 %v573, %v309
    %v577 = vmul.f32 %v574, %v312
    %v578 = vmul.f32 %v575, %v311
    %582 = vrot.lane.b32.xlu0 %v576, 111
    %v583 = vpop.permute.xlu0 %582
    %584 = vrot.lane.b32.xlu0 %v577, 111
    %v585 = vpop.permute.xlu0 %584
    %586 = vrot.lane.b32.xlu0 %v578, 111
    %v587 = vpop.permute.xlu0 %586
    %v588 = vsel %vm106, %v583, %v585
    %v589 = vsel %vm106, %v585, %v587
    %592 = vst [vmem:[#allocation3 + $0x80] sm:$0xf0] %v588
    %593 = vst [vmem:[#allocation3 + $0x88] sm:$0xf0] %v589
    %v594 = vld [vmem:[%s3] sm:$0xf]
    %v595 = vld [vmem:[%s4] sm:$0xf]
    %v596 = vld [vmem:[#allocation3] sm:$0xff]
    %v597 = vld [vmem:[#allocation3 + $0x8] sm:$0xff]
    %v598 = vld [vmem:[#allocation3 + $0x10] sm:$0xff]
    %v599 = vld [vmem:[#allocation3 + $0x18] sm:$0xff]
    %v600 = vld [vmem:[#allocation3 + $0x20] sm:$0xff]
    %v601 = vld [vmem:[#allocation3 + $0x28] sm:$0xff]
    %v602 = vld [vmem:[#allocation3 + $0x30] sm:$0xff]
    %v603 = vld [vmem:[#allocation3 + $0x38] sm:$0xff]
    %v604 = vld [vmem:[#allocation3 + $0x40] sm:$0xff]
    %v605 = vld [vmem:[#allocation3 + $0x48] sm:$0xff]
    %v606 = vld [vmem:[#allocation3 + $0x50] sm:$0xff]
    %v607 = vld [vmem:[#allocation3 + $0x58] sm:$0xff]
    %v608 = vld [vmem:[#allocation3 + $0x60] sm:$0xff]
    %v609 = vld [vmem:[#allocation3 + $0x68] sm:$0xff]
    %v610 = vld [vmem:[#allocation3 + $0x70] sm:$0xff]
    %v611 = vld [vmem:[#allocation3 + $0x78] sm:$0xff]
    %v612 = vld [vmem:[#allocation3 + $0x80] sm:$0xff]
    %v613 = vld [vmem:[#allocation3 + $0x88] sm:$0xff]
    %615 = vset.pattern.permute.xlu0 0
    %616 = vperm.xlu0 %615, %v595
    %v617 = vpop.permute.xlu0 %616
    %vm619 = vcmask 588800
    %v621 = vsel %vm619, %v594, 0
    %623 = vmatpush.msra.mxu0 0.0
    %624 = vmatpush.msra.mxu0 0.0
    %625 = vmatpush.msra.mxu0 0.0
    %626 = vmatpush.msra.mxu0 0.0
    %627 = vmatpush.msra.mxu0 0.0
    %628 = vmatpush.msra.mxu0 0.0
    %629 = vmatpush.msra.mxu0 0.0
    %630 = vmatpush.msra.mxu0 %v612
    %631 = vmatpush.msra.mxu0 %v610
    %632 = vmatpush.msra.mxu0 %v608
    %633 = vmatpush.msra.mxu0 %v606
    %634 = vmatpush.msra.mxu0 %v604
    %635 = vmatpush.msra.mxu0 %v602
    %636 = vmatpush.msra.mxu0 %v600
    %637 = vmatpush.msra.mxu0 %v598
    %638 = vmatpush.msra.mxu0 %v596
    %639 = vmatmul.f32.gmra.mxu0 %v621
    %v640 = vpop.f32.mrf.mxu0
    %v641 = vadd.f32 %v617, %v640
    %642 = vdwg.mxu0
    %643 = vmatpush.msra.mxu0 0.0
    %644 = vmatpush.msra.mxu0 0.0
    %645 = vmatpush.msra.mxu0 0.0
    %646 = vmatpush.msra.mxu0 0.0
    %647 = vmatpush.msra.mxu0 0.0
    %648 = vmatpush.msra.mxu0 0.0
    %649 = vmatpush.msra.mxu0 0.0
    %650 = vmatpush.msra.mxu0 %v613
    %651 = vmatpush.msra.mxu0 %v611
    %652 = vmatpush.msra.mxu0 %v609
    %653 = vmatpush.msra.mxu0 %v607
    %654 = vmatpush.msra.mxu0 %v605
    %655 = vmatpush.msra.mxu0 %v603
    %656 = vmatpush.msra.mxu0 %v601
    %657 = vmatpush.msra.mxu0 %v599
    %658 = vmatpush.msra.mxu0 %v597
    %659 = vmatmul.f32.gmra.mxu0 %v621
    %v660 = vpop.f32.mrf.mxu0
    %v661 = vadd.f32 %v617, %v660
    %662 = vdwg.mxu0
    %vm663 = vcmp.gt.f32.partialorder %v641, 0.0
    %vm664 = vcmp.gt.f32.partialorder %v661, 0.0
    %v665 = vmul.f32 %v641, 0.2
    %v666 = vmul.f32 %v661, 0.2
    %v667 = vsel %vm663, %v641, %v665
    %v668 = vsel %vm664, %v661, %v666
    %669 = vst [vmem:[#allocation2 + $0x28] sm:$0xf] %v667
    %670 = vst [vmem:[#allocation2 + $0x30] sm:$0xf] %v668
    %v671 = vld [vmem:[#allocation2 + $0x20] sm:$0xf]
    %v672 = vld [vmem:[#allocation2 + $0x28] sm:$0xf]
    %v673 = vld [vmem:[#allocation2 + $0x30] sm:$0xf]
    %v674 = vmul.f32 %v671, %v103
    %v675 = vmul.f32 %v672, %v107
    %v676 = vmul.f32 %v673, %v105
    %680 = vrot.lane.b32.xlu0 %v674, 17
    %v681 = vpop.permute.xlu0 %680
    %682 = vrot.lane.b32.xlu0 %v675, 17
    %v683 = vpop.permute.xlu0 %682
    %684 = vrot.lane.b32.xlu0 %v676, 17
    %v685 = vpop.permute.xlu0 %684
    %v686 = vsel %vm85, %v681, %v683
    %v687 = vsel %vm85, %v683, %v685
    %690 = vst [vmem:[#allocation3 + $0x90] sm:$0xf] %v686
    %691 = vst [vmem:[#allocation3 + $0x98] sm:$0xf] %v687
    %v692 = vld [vmem:[#allocation2 + $0x20] sm:$0xf]
    %v693 = vld [vmem:[#allocation2 + $0x28] sm:$0xf]
    %v694 = vld [vmem:[#allocation2 + $0x30] sm:$0xf]
    %v698 = vrot.slane %v692, 4
    %v699 = vrot.slane %v693, 4
    %v700 = vrot.slane %v694, 4
    %701 = vrot.lane.b32.xlu0 %v698, 16
    %v702 = vpop.permute.xlu0 %701
    %703 = vrot.lane.b32.xlu0 %v699, 16
    %v704 = vpop.permute.xlu0 %703
    %705 = vrot.lane.b32.xlu0 %v700, 16
    %v706 = vpop.permute.xlu0 %705
    %v707 = vsel %vm144, %v702, %v704
    %v708 = vsel %vm144, %v704, %v706
    %711 = vst [vmem:[#allocation3 + $0x90] sm:$0xf0] %v707
    %712 = vst [vmem:[#allocation3 + $0x98] sm:$0xf0] %v708
    %v713 = vld [vmem:[#allocation2 + $0x20] sm:$0xf]
    %v714 = vld [vmem:[#allocation2 + $0x28] sm:$0xf]
    %v715 = vld [vmem:[#allocation2 + $0x30] sm:$0xf]
    %v716 = vmul.f32 %v713, %v157
    %v717 = vmul.f32 %v714, %v161
    %v718 = vmul.f32 %v715, %v159
    %722 = vrot.lane.b32.xlu0 %v716, 15
    %v723 = vpop.permute.xlu0 %722
    %724 = vrot.lane.b32.xlu0 %v717, 15
    %v725 = vpop.permute.xlu0 %724
    %726 = vrot.lane.b32.xlu0 %v718, 15
    %v727 = vpop.permute.xlu0 %726
    %v728 = vsel %vm177, %v723, %v725
    %v729 = vsel %vm177, %v725, %v727
    %732 = vst [vmem:[#allocation3 + $0xa0] sm:$0xf] %v728
    %733 = vst [vmem:[#allocation3 + $0xa8] sm:$0xf] %v729
    %v734 = vld [vmem:[#allocation2 + $0x20] sm:$0xf]
    %v735 = vld [vmem:[#allocation2 + $0x28] sm:$0xf]
    %v736 = vld [vmem:[#allocation2 + $0x30] sm:$0xf]
    %v737 = vmul.f32 %v734, %v188
    %v738 = vmul.f32 %v735, %v192
    %v739 = vmul.f32 %v736, %v190
    %v743 = vrot.slane %v737, 4
    %v744 = vrot.slane %v738, 4
    %v745 = vrot.slane %v739, 4
    %746 = vrot.lane.b32.xlu0 %v743, 1
    %v747 = vpop.permute.xlu0 %746
    %748 = vrot.lane.b32.xlu0 %v744, 1
    %v749 = vpop.permute.xlu0 %748
    %750 = vrot.lane.b32.xlu0 %v745, 1
    %v751 = vpop.permute.xlu0 %750
    %v752 = vsel %vm211, %v747, %v749
    %v753 = vsel %vm211, %v749, %v751
    %756 = vst [vmem:[#allocation3 + $0xa0] sm:$0xf0] %v752
    %757 = vst [vmem:[#allocation3 + $0xa8] sm:$0xf0] %v753
    %v758 = vld [vmem:[#allocation2 + $0x28] sm:$0xf]
    %v759 = vld [vmem:[#allocation2 + $0x30] sm:$0xf]
    %760 = vst [vmem:[#allocation3 + $0xb0] sm:$0xf] %v758
    %761 = vst [vmem:[#allocation3 + $0xb8] sm:$0xf] %v759
    %v762 = vld [vmem:[#allocation2 + $0x28] sm:$0xf]
    %v763 = vld [vmem:[#allocation2 + $0x30] sm:$0xf]
    %v764 = vld [vmem:[#allocation2 + $0x38] sm:$0xf]
    %v765 = vmul.f32 %v762, %v226
    %v766 = vmul.f32 %v763, %v229
    %v767 = vmul.f32 %v764, %v228
    %v771 = vrot.slane %v765, 4
    %v772 = vrot.slane %v766, 4
    %v773 = vrot.slane %v767, 4
    %774 = vrot.lane.b32.xlu0 %v771, 127
    %v775 = vpop.permute.xlu0 %774
    %776 = vrot.lane.b32.xlu0 %v772, 127
    %v777 = vpop.permute.xlu0 %776
    %778 = vrot.lane.b32.xlu0 %v773, 127
    %v779 = vpop.permute.xlu0 %778
    %v780 = vsel %vm191, %v775, %v777
    %v781 = vsel %vm191, %v777, %v779
    %784 = vst [vmem:[#allocation3 + $0xb0] sm:$0xf0] %v780
    %785 = vst [vmem:[#allocation3 + $0xb8] sm:$0xf0] %v781
    %v786 = vld [vmem:[#allocation2 + $0x28] sm:$0xf]
    %v787 = vld [vmem:[#allocation2 + $0x30] sm:$0xf]
    %v788 = vld [vmem:[#allocation2 + $0x38] sm:$0xf]
    %v789 = vmul.f32 %v786, %v258
    %v790 = vmul.f32 %v787, %v261
    %v791 = vmul.f32 %v788, %v260
    %795 = vrot.lane.b32.xlu0 %v789, 113
    %v796 = vpop.permute.xlu0 %795
    %797 = vrot.lane.b32.xlu0 %v790, 113
    %v798 = vpop.permute.xlu0 %797
    %799 = vrot.lane.b32.xlu0 %v791, 113
    %v800 = vpop.permute.xlu0 %799
    %v801 = vsel %vm160, %v796, %v798
    %v802 = vsel %vm160, %v798, %v800
    %805 = vst [vmem:[#allocation3 + $0xc0] sm:$0xf] %v801
    %806 = vst [vmem:[#allocation3 + $0xc8] sm:$0xf] %v802
    %v807 = vld [vmem:[#allocation2 + $0x28] sm:$0xf]
    %v808 = vld [vmem:[#allocation2 + $0x30] sm:$0xf]
    %v809 = vld [vmem:[#allocation2 + $0x38] sm:$0xf]
    %v813 = vrot.slane %v807, 4
    %v814 = vrot.slane %v808, 4
    %v815 = vrot.slane %v809, 4
    %816 = vrot.lane.b32.xlu0 %v813, 112
    %v817 = vpop.permute.xlu0 %816
    %818 = vrot.lane.b32.xlu0 %v814, 112
    %v819 = vpop.permute.xlu0 %818
    %820 = vrot.lane.b32.xlu0 %v815, 112
    %v821 = vpop.permute.xlu0 %820
    %v822 = vsel %vm298, %v817, %v819
    %v823 = vsel %vm298, %v819, %v821
    %826 = vst [vmem:[#allocation3 + $0xc0] sm:$0xf0] %v822
    %827 = vst [vmem:[#allocation3 + $0xc8] sm:$0xf0] %v823
    %v828 = vld [vmem:[#allocation2 + $0x28] sm:$0xf]
    %v829 = vld [vmem:[#allocation2 + $0x30] sm:$0xf]
    %v830 = vld [vmem:[#allocation2 + $0x38] sm:$0xf]
    %v831 = vmul.f32 %v828, %v309
    %v832 = vmul.f32 %v829, %v312
    %v833 = vmul.f32 %v830, %v311
    %837 = vrot.lane.b32.xlu0 %v831, 111
    %v838 = vpop.permute.xlu0 %837
    %839 = vrot.lane.b32.xlu0 %v832, 111
    %v840 = vpop.permute.xlu0 %839
    %841 = vrot.lane.b32.xlu0 %v833, 111
    %v842 = vpop.permute.xlu0 %841
    %v843 = vsel %vm106, %v838, %v840
    %v844 = vsel %vm106, %v840, %v842
    %847 = vst [vmem:[#allocation3 + $0xd0] sm:$0xf] %v843
    %848 = vst [vmem:[#allocation3 + $0xd8] sm:$0xf] %v844
    %v849 = vld [vmem:[%s5] sm:$0xf]
    %v850 = vld [vmem:[%s6] sm:$0xf]
    %v851 = vld [vmem:[#allocation3] sm:$0xff]
    %v852 = vld [vmem:[#allocation3 + $0x8] sm:$0xff]
    %v853 = vld [vmem:[#allocation3 + $0x10] sm:$0xff]
    %v854 = vld [vmem:[#allocation3 + $0x18] sm:$0xff]
    %v855 = vld [vmem:[#allocation3 + $0x20] sm:$0xff]
    %v856 = vld [vmem:[#allocation3 + $0x28] sm:$0xff]
    %v857 = vld [vmem:[#allocation3 + $0x30] sm:$0xff]
    %v858 = vld [vmem:[#allocation3 + $0x38] sm:$0xff]
    %v859 = vld [vmem:[#allocation3 + $0x40] sm:$0xff]
    %v860 = vld [vmem:[#allocation3 + $0x48] sm:$0xff]
    %v861 = vld [vmem:[#allocation3 + $0x50] sm:$0xff]
    %v862 = vld [vmem:[#allocation3 + $0x58] sm:$0xff]
    %v863 = vld [vmem:[#allocation3 + $0x60] sm:$0xff]
    %v864 = vld [vmem:[#allocation3 + $0x68] sm:$0xff]
    %v865 = vld [vmem:[#allocation3 + $0x70] sm:$0xff]
    %v866 = vld [vmem:[#allocation3 + $0x78] sm:$0xff]
    %v867 = vld [vmem:[#allocation3 + $0x80] sm:$0xff]
    %v868 = vld [vmem:[#allocation3 + $0x88] sm:$0xff]
    %v869 = vld [vmem:[#allocation3 + $0x90] sm:$0xff]
    %v870 = vld [vmem:[#allocation3 + $0x98] sm:$0xff]
    %v871 = vld [vmem:[#allocation3 + $0xa0] sm:$0xff]
    %v872 = vld [vmem:[#allocation3 + $0xa8] sm:$0xff]
    %v873 = vld [vmem:[#allocation3 + $0xb0] sm:$0xff]
    %v874 = vld [vmem:[#allocation3 + $0xb8] sm:$0xff]
    %v875 = vld [vmem:[#allocation3 + $0xc0] sm:$0xff]
    %v876 = vld [vmem:[#allocation3 + $0xc8] sm:$0xff]
    %v877 = vld [vmem:[#allocation3 + $0xd0] sm:$0xf]
    %v878 = vld [vmem:[#allocation3 + $0xd8] sm:$0xf]
    %880 = vset.pattern.permute.xlu0 0
    %881 = vperm.xlu0 %880, %v850
    %v882 = vpop.permute.xlu0 %881
    %vm884 = vcmask 883712
    %v886 = vsel %vm884, %v849, 0
    %v889 = vsel %vm355, %v877, 0
    %v892 = vsel %vm355, %v878, 0
    %894 = vmatpush.msra.mxu0 0.0
    %895 = vmatpush.msra.mxu0 0.0
    %896 = vmatpush.msra.mxu0 %v889
    %897 = vmatpush.msra.mxu0 %v875
    %898 = vmatpush.msra.mxu0 %v873
    %899 = vmatpush.msra.mxu0 %v871
    %900 = vmatpush.msra.mxu0 %v869
    %901 = vmatpush.msra.mxu0 %v867
    %902 = vmatpush.msra.mxu0 %v865
    %903 = vmatpush.msra.mxu0 %v863
    %904 = vmatpush.msra.mxu0 %v861
    %905 = vmatpush.msra.mxu0 %v859
    %906 = vmatpush.msra.mxu0 %v857
    %907 = vmatpush.msra.mxu0 %v855
    %908 = vmatpush.msra.mxu0 %v853
    %909 = vmatpush.msra.mxu0 %v851
    %910 = vmatmul.f32.gmra.mxu0 %v886
    %v911 = vpop.f32.mrf.mxu0
    %v912 = vadd.f32 %v882, %v911
    %913 = vdwg.mxu0
    %914 = vmatpush.msra.mxu0 0.0
    %915 = vmatpush.msra.mxu0 0.0
    %916 = vmatpush.msra.mxu0 %v892
    %917 = vmatpush.msra.mxu0 %v876
    %918 = vmatpush.msra.mxu0 %v874
    %919 = vmatpush.msra.mxu0 %v872
    %920 = vmatpush.msra.mxu0 %v870
    %921 = vmatpush.msra.mxu0 %v868
    %922 = vmatpush.msra.mxu0 %v866
    %923 = vmatpush.msra.mxu0 %v864
    %924 = vmatpush.msra.mxu0 %v862
    %925 = vmatpush.msra.mxu0 %v860
    %926 = vmatpush.msra.mxu0 %v858
    %927 = vmatpush.msra.mxu0 %v856
    %928 = vmatpush.msra.mxu0 %v854
    %929 = vmatpush.msra.mxu0 %v852
    %930 = vmatmul.f32.gmra.mxu0 %v886
    %v931 = vpop.f32.mrf.mxu0
    %v932 = vadd.f32 %v882, %v931
    %933 = vdwg.mxu0
    %vm934 = vcmp.gt.f32.partialorder %v912, 0.0
    %vm935 = vcmp.gt.f32.partialorder %v932, 0.0
    %v936 = vmul.f32 %v912, 0.2
    %v937 = vmul.f32 %v932, 0.2
    %v938 = vsel %vm934, %v912, %v936
    %v939 = vsel %vm935, %v932, %v937
    %v942 = vrot.slane %v938, 4
    %v943 = vrot.slane %v939, 4
    %946 = vst [vmem:[#allocation2 + $0x28] sm:$0xf0] %v942
    %947 = vst [vmem:[#allocation2 + $0x30] sm:$0xf0] %v943
    %v948 = vld [vmem:[#allocation2 + $0x8] sm:$0xff]
    %v949 = vld [vmem:[#allocation2 + $0x10] sm:$0xff]
    %v950 = vld [vmem:[#allocation2 + $0x28] sm:$0xff]
    %v951 = vld [vmem:[#allocation2 + $0x30] sm:$0xff]
    %952 = vst [vmem:[#allocation7] sm:$0xff] %v948
    %953 = vst [vmem:[#allocation7 + $0x8] sm:$0xff] %v949
    %954 = vst [vmem:[#allocation7 + $0x10] sm:$0xff] %v950
    %955 = vst [vmem:[#allocation7 + $0x18] sm:$0xff] %v951
    %s956 = scalar_lea.vmem [#allocation4], 8
    %v957 = vld [vmem:[%s956] sm:$0xff]
    %959 = vst [vmem:[#allocation1] ss:$2 sm:$0xff] %v957
    %v960 = vld.sshfl [vmem:[#allocation1] sm:$0xff pattern:$0x75316420]
    %v961 = vld.sshfl [vmem:[#allocation1 + $0x8] sm:$0xff pattern:$0x75316420]
    %964 = vst [vmem:[#allocation2 + $0x8] sm:$0xf] %v960
    %965 = vst [vmem:[#allocation2 + $0x10] sm:$0xf] %v961
    %v966 = vld [vmem:[#allocation2] sm:$0xf]
    %v967 = vld [vmem:[#allocation2 + $0x8] sm:$0xf]
    %v968 = vld [vmem:[#allocation2 + $0x10] sm:$0xf]
    %v969 = vmul.f32 %v966, %v103
    %v970 = vmul.f32 %v967, %v107
    %v971 = vmul.f32 %v968, %v105
    %975 = vrot.lane.b32.xlu0 %v969, 17
    %v976 = vpop.permute.xlu0 %975
    %977 = vrot.lane.b32.xlu0 %v970, 17
    %v978 = vpop.permute.xlu0 %977
    %979 = vrot.lane.b32.xlu0 %v971, 17
    %v980 = vpop.permute.xlu0 %979
    %v981 = vsel %vm85, %v976, %v978
    %v982 = vsel %vm85, %v978, %v980
    %985 = vst [vmem:[#allocation3] sm:$0xf] %v981
    %986 = vst [vmem:[#allocation3 + $0x8] sm:$0xf] %v982
    %v987 = vld [vmem:[#allocation2] sm:$0xf]
    %v988 = vld [vmem:[#allocation2 + $0x8] sm:$0xf]
    %v989 = vld [vmem:[#allocation2 + $0x10] sm:$0xf]
    %v993 = vrot.slane %v987, 4
    %v994 = vrot.slane %v988, 4
    %v995 = vrot.slane %v989, 4
    %996 = vrot.lane.b32.xlu0 %v993, 16
    %v997 = vpop.permute.xlu0 %996
    %998 = vrot.lane.b32.xlu0 %v994, 16
    %v999 = vpop.permute.xlu0 %998
    %1000 = vrot.lane.b32.xlu0 %v995, 16
    %v1001 = vpop.permute.xlu0 %1000
    %v1002 = vsel %vm144, %v997, %v999
    %v1003 = vsel %vm144, %v999, %v1001
    %1006 = vst [vmem:[#allocation3] sm:$0xf0] %v1002
    %1007 = vst [vmem:[#allocation3 + $0x8] sm:$0xf0] %v1003
    %v1008 = vld [vmem:[#allocation2] sm:$0xf]
    %v1009 = vld [vmem:[#allocation2 + $0x8] sm:$0xf]
    %v1010 = vld [vmem:[#allocation2 + $0x10] sm:$0xf]
    %v1011 = vmul.f32 %v1008, %v157
    %v1012 = vmul.f32 %v1009, %v161
    %v1013 = vmul.f32 %v1010, %v159
    %1017 = vrot.lane.b32.xlu0 %v1011, 15
    %v1018 = vpop.permute.xlu0 %1017
    %1019 = vrot.lane.b32.xlu0 %v1012, 15
    %v1020 = vpop.permute.xlu0 %1019
    %1021 = vrot.lane.b32.xlu0 %v1013, 15
    %v1022 = vpop.permute.xlu0 %1021
    %v1023 = vsel %vm177, %v1018, %v1020
    %v1024 = vsel %vm177, %v1020, %v1022
    %1027 = vst [vmem:[#allocation3 + $0x10] sm:$0xf] %v1023
    %1028 = vst [vmem:[#allocation3 + $0x18] sm:$0xf] %v1024
    %v1029 = vld [vmem:[#allocation2] sm:$0xf]
    %v1030 = vld [vmem:[#allocation2 + $0x8] sm:$0xf]
    %v1031 = vld [vmem:[#allocation2 + $0x10] sm:$0xf]
    %v1032 = vmul.f32 %v1029, %v188
    %v1033 = vmul.f32 %v1030, %v192
    %v1034 = vmul.f32 %v1031, %v190
    %v1038 = vrot.slane %v1032, 4
    %v1039 = vrot.slane %v1033, 4
    %v1040 = vrot.slane %v1034, 4
    %1041 = vrot.lane.b32.xlu0 %v1038, 1
    %v1042 = vpop.permute.xlu0 %1041
    %1043 = vrot.lane.b32.xlu0 %v1039, 1
    %v1044 = vpop.permute.xlu0 %1043
    %1045 = vrot.lane.b32.xlu0 %v1040, 1
    %v1046 = vpop.permute.xlu0 %1045
    %v1047 = vsel %vm211, %v1042, %v1044
    %v1048 = vsel %vm211, %v1044, %v1046
    %1051 = vst [vmem:[#allocation3 + $0x10] sm:$0xf0] %v1047
    %1052 = vst [vmem:[#allocation3 + $0x18] sm:$0xf0] %v1048
    %v1053 = vld [vmem:[#allocation2 + $0x8] sm:$0xf]
    %v1054 = vld [vmem:[#allocation2 + $0x10] sm:$0xf]
    %1055 = vst [vmem:[#allocation3 + $0x20] sm:$0xf] %v1053
    %1056 = vst [vmem:[#allocation3 + $0x28] sm:$0xf] %v1054
    %v1057 = vld [vmem:[#allocation2 + $0x8] sm:$0xf]
    %v1058 = vld [vmem:[#allocation2 + $0x10] sm:$0xf]
    %v1059 = vld [vmem:[#allocation2 + $0x18] sm:$0xf]
    %v1060 = vmul.f32 %v1057, %v226
    %v1061 = vmul.f32 %v1058, %v229
    %v1062 = vmul.f32 %v1059, %v228
    %v1066 = vrot.slane %v1060, 4
    %v1067 = vrot.slane %v1061, 4
    %v1068 = vrot.slane %v1062, 4
    %1069 = vrot.lane.b32.xlu0 %v1066, 127
    %v1070 = vpop.permute.xlu0 %1069
    %1071 = vrot.lane.b32.xlu0 %v1067, 127
    %v1072 = vpop.permute.xlu0 %1071
    %1073 = vrot.lane.b32.xlu0 %v1068, 127
    %v1074 = vpop.permute.xlu0 %1073
    %v1075 = vsel %vm191, %v1070, %v1072
    %v1076 = vsel %vm191, %v1072, %v1074
    %1079 = vst [vmem:[#allocation3 + $0x20] sm:$0xf0] %v1075
    %1080 = vst [vmem:[#allocation3 + $0x28] sm:$0xf0] %v1076
    %v1081 = vld [vmem:[#allocation2 + $0x8] sm:$0xf]
    %v1082 = vld [vmem:[#allocation2 + $0x10] sm:$0xf]
    %v1083 = vld [vmem:[#allocation2 + $0x18] sm:$0xf]
    %v1084 = vmul.f32 %v1081, %v258
    %v1085 = vmul.f32 %v1082, %v261
    %v1086 = vmul.f32 %v1083, %v260
    %1090 = vrot.lane.b32.xlu0 %v1084, 113
    %v1091 = vpop.permute.xlu0 %1090
    %1092 = vrot.lane.b32.xlu0 %v1085, 113
    %v1093 = vpop.permute.xlu0 %1092
    %1094 = vrot.lane.b32.xlu0 %v1086, 113
    %v1095 = vpop.permute.xlu0 %1094
    %v1096 = vsel %vm160, %v1091, %v1093
    %v1097 = vsel %vm160, %v1093, %v1095
    %1100 = vst [vmem:[#allocation3 + $0x30] sm:$0xf] %v1096
    %1101 = vst [vmem:[#allocation3 + $0x38] sm:$0xf] %v1097
    %v1102 = vld [vmem:[#allocation2 + $0x8] sm:$0xf]
    %v1103 = vld [vmem:[#allocation2 + $0x10] sm:$0xf]
    %v1104 = vld [vmem:[#allocation2 + $0x18] sm:$0xf]
    %v1108 = vrot.slane %v1102, 4
    %v1109 = vrot.slane %v1103, 4
    %v1110 = vrot.slane %v1104, 4
    %1111 = vrot.lane.b32.xlu0 %v1108, 112
    %v1112 = vpop.permute.xlu0 %1111
    %1113 = vrot.lane.b32.xlu0 %v1109, 112
    %v1114 = vpop.permute.xlu0 %1113
    %1115 = vrot.lane.b32.xlu0 %v1110, 112
    %v1116 = vpop.permute.xlu0 %1115
    %v1117 = vsel %vm298, %v1112, %v1114
    %v1118 = vsel %vm298, %v1114, %v1116
    %1121 = vst [vmem:[#allocation3 + $0x30] sm:$0xf0] %v1117
    %1122 = vst [vmem:[#allocation3 + $0x38] sm:$0xf0] %v1118
    %v1123 = vld [vmem:[#allocation2 + $0x8] sm:$0xf]
    %v1124 = vld [vmem:[#allocation2 + $0x10] sm:$0xf]
    %v1125 = vld [vmem:[#allocation2 + $0x18] sm:$0xf]
    %v1126 = vmul.f32 %v1123, %v309
    %v1127 = vmul.f32 %v1124, %v312
    %v1128 = vmul.f32 %v1125, %v311
    %1132 = vrot.lane.b32.xlu0 %v1126, 111
    %v1133 = vpop.permute.xlu0 %1132
    %1134 = vrot.lane.b32.xlu0 %v1127, 111
    %v1135 = vpop.permute.xlu0 %1134
    %1136 = vrot.lane.b32.xlu0 %v1128, 111
    %v1137 = vpop.permute.xlu0 %1136
    %v1138 = vsel %vm106, %v1133, %v1135
    %v1139 = vsel %vm106, %v1135, %v1137
    %1142 = vst [vmem:[#allocation3 + $0x40] sm:$0xf] %v1138
    %1143 = vst [vmem:[#allocation3 + $0x48] sm:$0xf] %v1139
    %v1144 = vld [vmem:[%s1] sm:$0xf]
    %v1145 = vld [vmem:[%s2] sm:$0xf]
    %v1146 = vld [vmem:[#allocation3] sm:$0xff]
    %v1147 = vld [vmem:[#allocation3 + $0x8] sm:$0xff]
    %v1148 = vld [vmem:[#allocation3 + $0x10] sm:$0xff]
    %v1149 = vld [vmem:[#allocation3 + $0x18] sm:$0xff]
    %v1150 = vld [vmem:[#allocation3 + $0x20] sm:$0xff]
    %v1151 = vld [vmem:[#allocation3 + $0x28] sm:$0xff]
    %v1152 = vld [vmem:[#allocation3 + $0x30] sm:$0xff]
    %v1153 = vld [vmem:[#allocation3 + $0x38] sm:$0xff]
    %v1154 = vld [vmem:[#allocation3 + $0x40] sm:$0xf]
    %v1155 = vld [vmem:[#allocation3 + $0x48] sm:$0xf]
    %1157 = vset.pattern.permute.xlu0 0
    %1158 = vperm.xlu0 %1157, %v1145
    %v1159 = vpop.permute.xlu0 %1158
    %v1162 = vsel %vm351, %v1144, 0
    %v1165 = vsel %vm355, %v1154, 0
    %v1168 = vsel %vm355, %v1155, 0
    %1170 = vmatpush.msra.mxu0 0.0
    %1171 = vmatpush.msra.mxu0 0.0
    %1172 = vmatpush.msra.mxu0 0.0
    %1173 = vmatpush.msra.mxu0 0.0
    %1174 = vmatpush.msra.mxu0 0.0
    %1175 = vmatpush.msra.mxu0 0.0
    %1176 = vmatpush.msra.mxu0 0.0
    %1177 = vmatpush.msra.mxu0 0.0
    %1178 = vmatpush.msra.mxu0 0.0
    %1179 = vmatpush.msra.mxu0 0.0
    %1180 = vmatpush.msra.mxu0 0.0
    %1181 = vmatpush.msra.mxu0 %v1165
    %1182 = vmatpush.msra.mxu0 %v1152
    %1183 = vmatpush.msra.mxu0 %v1150
    %1184 = vmatpush.msra.mxu0 %v1148
    %1185 = vmatpush.msra.mxu0 %v1146
    %1186 = vmatmul.f32.gmra.mxu0 %v1162
    %v1187 = vpop.f32.mrf.mxu0
    %v1188 = vadd.f32 %v1159, %v1187
    %1189 = vdwg.mxu0
    %1190 = vmatpush.msra.mxu0 0.0
    %1191 = vmatpush.msra.mxu0 0.0
    %1192 = vmatpush.msra.mxu0 0.0
    %1193 = vmatpush.msra.mxu0 0.0
    %1194 = vmatpush.msra.mxu0 0.0
    %1195 = vmatpush.msra.mxu0 0.0
    %1196 = vmatpush.msra.mxu0 0.0
    %1197 = vmatpush.msra.mxu0 0.0
    %1198 = vmatpush.msra.mxu0 0.0
    %1199 = vmatpush.msra.mxu0 0.0
    %1200 = vmatpush.msra.mxu0 0.0
    %1201 = vmatpush.msra.mxu0 %v1168
    %1202 = vmatpush.msra.mxu0 %v1153
    %1203 = vmatpush.msra.mxu0 %v1151
    %1204 = vmatpush.msra.mxu0 %v1149
    %1205 = vmatpush.msra.mxu0 %v1147
    %1206 = vmatmul.f32.gmra.mxu0 %v1162
    %v1207 = vpop.f32.mrf.mxu0
    %v1208 = vadd.f32 %v1159, %v1207
    %1209 = vdwg.mxu0
    %vm1210 = vcmp.gt.f32.partialorder %v1188, 0.0
    %vm1211 = vcmp.gt.f32.partialorder %v1208, 0.0
    %v1212 = vmul.f32 %v1188, 0.2
    %v1213 = vmul.f32 %v1208, 0.2
    %v1214 = vsel %vm1210, %v1188, %v1212
    %v1215 = vsel %vm1211, %v1208, %v1213
    %v1218 = vrot.slane %v1214, 4
    %v1219 = vrot.slane %v1215, 4
    %1222 = vst [vmem:[#allocation2 + $0x8] sm:$0xf0] %v1218
    %1223 = vst [vmem:[#allocation2 + $0x10] sm:$0xf0] %v1219
    %v1224 = vld [vmem:[#allocation2] sm:$0xf0]
    %v1225 = vld [vmem:[#allocation2 + $0x8] sm:$0xf0]
    %v1226 = vld [vmem:[#allocation2 + $0x10] sm:$0xf0]
    %v1227 = vmul.f32 %v1224, %v103
    %v1228 = vmul.f32 %v1225, %v107
    %v1229 = vmul.f32 %v1226, %v105
    %1233 = vrot.lane.b32.xlu0 %v1227, 17
    %v1234 = vpop.permute.xlu0 %1233
    %1235 = vrot.lane.b32.xlu0 %v1228, 17
    %v1236 = vpop.permute.xlu0 %1235
    %1237 = vrot.lane.b32.xlu0 %v1229, 17
    %v1238 = vpop.permute.xlu0 %1237
    %v1239 = vsel %vm85, %v1234, %v1236
    %v1240 = vsel %vm85, %v1236, %v1238
    %1243 = vst [vmem:[#allocation3 + $0x40] sm:$0xf0] %v1239
    %1244 = vst [vmem:[#allocation3 + $0x48] sm:$0xf0] %v1240
    %v1245 = vld [vmem:[#allocation2] sm:$0xf0]
    %v1246 = vld [vmem:[#allocation2 + $0x8] sm:$0xf0]
    %v1247 = vld [vmem:[#allocation2 + $0x10] sm:$0xf0]
    %v1251 = vrot.slane %v1245, 4
    %v1252 = vrot.slane %v1246, 4
    %v1253 = vrot.slane %v1247, 4
    %1254 = vrot.lane.b32.xlu0 %v1251, 16
    %v1255 = vpop.permute.xlu0 %1254
    %1256 = vrot.lane.b32.xlu0 %v1252, 16
    %v1257 = vpop.permute.xlu0 %1256
    %1258 = vrot.lane.b32.xlu0 %v1253, 16
    %v1259 = vpop.permute.xlu0 %1258
    %v1260 = vsel %vm144, %v1255, %v1257
    %v1261 = vsel %vm144, %v1257, %v1259
    %1264 = vst [vmem:[#allocation3 + $0x50] sm:$0xf] %v1260
    %1265 = vst [vmem:[#allocation3 + $0x58] sm:$0xf] %v1261
    %v1266 = vld [vmem:[#allocation2] sm:$0xf0]
    %v1267 = vld [vmem:[#allocation2 + $0x8] sm:$0xf0]
    %v1268 = vld [vmem:[#allocation2 + $0x10] sm:$0xf0]
    %v1269 = vmul.f32 %v1266, %v157
    %v1270 = vmul.f32 %v1267, %v161
    %v1271 = vmul.f32 %v1268, %v159
    %1275 = vrot.lane.b32.xlu0 %v1269, 15
    %v1276 = vpop.permute.xlu0 %1275
    %1277 = vrot.lane.b32.xlu0 %v1270, 15
    %v1278 = vpop.permute.xlu0 %1277
    %1279 = vrot.lane.b32.xlu0 %v1271, 15
    %v1280 = vpop.permute.xlu0 %1279
    %v1281 = vsel %vm177, %v1276, %v1278
    %v1282 = vsel %vm177, %v1278, %v1280
    %1285 = vst [vmem:[#allocation3 + $0x50] sm:$0xf0] %v1281
    %1286 = vst [vmem:[#allocation3 + $0x58] sm:$0xf0] %v1282
    %v1287 = vld [vmem:[#allocation2] sm:$0xf0]
    %v1288 = vld [vmem:[#allocation2 + $0x8] sm:$0xf0]
    %v1289 = vld [vmem:[#allocation2 + $0x10] sm:$0xf0]
    %v1290 = vmul.f32 %v1287, %v188
    %v1291 = vmul.f32 %v1288, %v192
    %v1292 = vmul.f32 %v1289, %v190
    %v1296 = vrot.slane %v1290, 4
    %v1297 = vrot.slane %v1291, 4
    %v1298 = vrot.slane %v1292, 4
    %1299 = vrot.lane.b32.xlu0 %v1296, 1
    %v1300 = vpop.permute.xlu0 %1299
    %1301 = vrot.lane.b32.xlu0 %v1297, 1
    %v1302 = vpop.permute.xlu0 %1301
    %1303 = vrot.lane.b32.xlu0 %v1298, 1
    %v1304 = vpop.permute.xlu0 %1303
    %v1305 = vsel %vm211, %v1300, %v1302
    %v1306 = vsel %vm211, %v1302, %v1304
    %1309 = vst [vmem:[#allocation3 + $0x60] sm:$0xf] %v1305
    %1310 = vst [vmem:[#allocation3 + $0x68] sm:$0xf] %v1306
    %v1311 = vld [vmem:[#allocation2 + $0x8] sm:$0xf0]
    %v1312 = vld [vmem:[#allocation2 + $0x10] sm:$0xf0]
    %1313 = vst [vmem:[#allocation3 + $0x60] sm:$0xf0] %v1311
    %1314 = vst [vmem:[#allocation3 + $0x68] sm:$0xf0] %v1312
    %v1315 = vld [vmem:[#allocation2 + $0x8] sm:$0xf0]
    %v1316 = vld [vmem:[#allocation2 + $0x10] sm:$0xf0]
    %v1317 = vld [vmem:[#allocation2 + $0x18] sm:$0xf0]
    %v1318 = vmul.f32 %v1315, %v226
    %v1319 = vmul.f32 %v1316, %v229
    %v1320 = vmul.f32 %v1317, %v228
    %v1324 = vrot.slane %v1318, 4
    %v1325 = vrot.slane %v1319, 4
    %v1326 = vrot.slane %v1320, 4
    %1327 = vrot.lane.b32.xlu0 %v1324, 127
    %v1328 = vpop.permute.xlu0 %1327
    %1329 = vrot.lane.b32.xlu0 %v1325, 127
    %v1330 = vpop.permute.xlu0 %1329
    %1331 = vrot.lane.b32.xlu0 %v1326, 127
    %v1332 = vpop.permute.xlu0 %1331
    %v1333 = vsel %vm191, %v1328, %v1330
    %v1334 = vsel %vm191, %v1330, %v1332
    %1337 = vst [vmem:[#allocation3 + $0x70] sm:$0xf] %v1333
    %1338 = vst [vmem:[#allocation3 + $0x78] sm:$0xf] %v1334
    %v1339 = vld [vmem:[#allocation2 + $0x8] sm:$0xf0]
    %v1340 = vld [vmem:[#allocation2 + $0x10] sm:$0xf0]
    %v1341 = vld [vmem:[#allocation2 + $0x18] sm:$0xf0]
    %v1342 = vmul.f32 %v1339, %v258
    %v1343 = vmul.f32 %v1340, %v261
    %v1344 = vmul.f32 %v1341, %v260
    %1348 = vrot.lane.b32.xlu0 %v1342, 113
    %v1349 = vpop.permute.xlu0 %1348
    %1350 = vrot.lane.b32.xlu0 %v1343, 113
    %v1351 = vpop.permute.xlu0 %1350
    %1352 = vrot.lane.b32.xlu0 %v1344, 113
    %v1353 = vpop.permute.xlu0 %1352
    %v1354 = vsel %vm160, %v1349, %v1351
    %v1355 = vsel %vm160, %v1351, %v1353
    %1358 = vst [vmem:[#allocation3 + $0x70] sm:$0xf0] %v1354
    %1359 = vst [vmem:[#allocation3 + $0x78] sm:$0xf0] %v1355
    %v1360 = vld [vmem:[#allocation2 + $0x8] sm:$0xf0]
    %v1361 = vld [vmem:[#allocation2 + $0x10] sm:$0xf0]
    %v1362 = vld [vmem:[#allocation2 + $0x18] sm:$0xf0]
    %v1366 = vrot.slane %v1360, 4
    %v1367 = vrot.slane %v1361, 4
    %v1368 = vrot.slane %v1362, 4
    %1369 = vrot.lane.b32.xlu0 %v1366, 112
    %v1370 = vpop.permute.xlu0 %1369
    %1371 = vrot.lane.b32.xlu0 %v1367, 112
    %v1372 = vpop.permute.xlu0 %1371
    %1373 = vrot.lane.b32.xlu0 %v1368, 112
    %v1374 = vpop.permute.xlu0 %1373
    %v1375 = vsel %vm298, %v1370, %v1372
    %v1376 = vsel %vm298, %v1372, %v1374
    %1379 = vst [vmem:[#allocation3 + $0x80] sm:$0xf] %v1375
    %1380 = vst [vmem:[#allocation3 + $0x88] sm:$0xf] %v1376
    %v1381 = vld [vmem:[#allocation2 + $0x8] sm:$0xf0]
    %v1382 = vld [vmem:[#allocation2 + $0x10] sm:$0xf0]
    %v1383 = vld [vmem:[#allocation2 + $0x18] sm:$0xf0]
    %v1384 = vmul.f32 %v1381, %v309
    %v1385 = vmul.f32 %v1382, %v312
    %v1386 = vmul.f32 %v1383, %v311
    %1390 = vrot.lane.b32.xlu0 %v1384, 111
    %v1391 = vpop.permute.xlu0 %1390
    %1392 = vrot.lane.b32.xlu0 %v1385, 111
    %v1393 = vpop.permute.xlu0 %1392
    %1394 = vrot.lane.b32.xlu0 %v1386, 111
    %v1395 = vpop.permute.xlu0 %1394
    %v1396 = vsel %vm106, %v1391, %v1393
    %v1397 = vsel %vm106, %v1393, %v1395
    %1400 = vst [vmem:[#allocation3 + $0x80] sm:$0xf0] %v1396
    %1401 = vst [vmem:[#allocation3 + $0x88] sm:$0xf0] %v1397
    %v1402 = vld [vmem:[%s3] sm:$0xf]
    %v1403 = vld [vmem:[%s4] sm:$0xf]
    %v1404 = vld [vmem:[#allocation3] sm:$0xff]
    %v1405 = vld [vmem:[#allocation3 + $0x8] sm:$0xff]
    %v1406 = vld [vmem:[#allocation3 + $0x10] sm:$0xff]
    %v1407 = vld [vmem:[#allocation3 + $0x18] sm:$0xff]
    %v1408 = vld [vmem:[#allocation3 + $0x20] sm:$0xff]
    %v1409 = vld [vmem:[#allocation3 + $0x28] sm:$0xff]
    %v1410 = vld [vmem:[#allocation3 + $0x30] sm:$0xff]
    %v1411 = vld [vmem:[#allocation3 + $0x38] sm:$0xff]
    %v1412 = vld [vmem:[#allocation3 + $0x40] sm:$0xff]
    %v1413 = vld [vmem:[#allocation3 + $0x48] sm:$0xff]
    %v1414 = vld [vmem:[#allocation3 + $0x50] sm:$0xff]
    %v1415 = vld [vmem:[#allocation3 + $0x58] sm:$0xff]
    %v1416 = vld [vmem:[#allocation3 + $0x60] sm:$0xff]
    %v1417 = vld [vmem:[#allocation3 + $0x68] sm:$0xff]
    %v1418 = vld [vmem:[#allocation3 + $0x70] sm:$0xff]
    %v1419 = vld [vmem:[#allocation3 + $0x78] sm:$0xff]
    %v1420 = vld [vmem:[#allocation3 + $0x80] sm:$0xff]
    %v1421 = vld [vmem:[#allocation3 + $0x88] sm:$0xff]
    %1423 = vset.pattern.permute.xlu0 0
    %1424 = vperm.xlu0 %1423, %v1403
    %v1425 = vpop.permute.xlu0 %1424
    %v1428 = vsel %vm619, %v1402, 0
    %1430 = vmatpush.msra.mxu0 0.0
    %1431 = vmatpush.msra.mxu0 0.0
    %1432 = vmatpush.msra.mxu0 0.0
    %1433 = vmatpush.msra.mxu0 0.0
    %1434 = vmatpush.msra.mxu0 0.0
    %1435 = vmatpush.msra.mxu0 0.0
    %1436 = vmatpush.msra.mxu0 0.0
    %1437 = vmatpush.msra.mxu0 %v1420
    %1438 = vmatpush.msra.mxu0 %v1418
    %1439 = vmatpush.msra.mxu0 %v1416
    %1440 = vmatpush.msra.mxu0 %v1414
    %1441 = vmatpush.msra.mxu0 %v1412
    %1442 = vmatpush.msra.mxu0 %v1410
    %1443 = vmatpush.msra.mxu0 %v1408
    %1444 = vmatpush.msra.mxu0 %v1406
    %1445 = vmatpush.msra.mxu0 %v1404
    %1446 = vmatmul.f32.gmra.mxu0 %v1428
    %v1447 = vpop.f32.mrf.mxu0
    %v1448 = vadd.f32 %v1425, %v1447
    %1449 = vdwg.mxu0
    %1450 = vmatpush.msra.mxu0 0.0
    %1451 = vmatpush.msra.mxu0 0.0
    %1452 = vmatpush.msra.mxu0 0.0
    %1453 = vmatpush.msra.mxu0 0.0
    %1454 = vmatpush.msra.mxu0 0.0
    %1455 = vmatpush.msra.mxu0 0.0
    %1456 = vmatpush.msra.mxu0 0.0
    %1457 = vmatpush.msra.mxu0 %v1421
    %1458 = vmatpush.msra.mxu0 %v1419
    %1459 = vmatpush.msra.mxu0 %v1417
    %1460 = vmatpush.msra.mxu0 %v1415
    %1461 = vmatpush.msra.mxu0 %v1413
    %1462 = vmatpush.msra.mxu0 %v1411
    %1463 = vmatpush.msra.mxu0 %v1409
    %1464 = vmatpush.msra.mxu0 %v1407
    %1465 = vmatpush.msra.mxu0 %v1405
    %1466 = vmatmul.f32.gmra.mxu0 %v1428
    %v1467 = vpop.f32.mrf.mxu0
    %v1468 = vadd.f32 %v1425, %v1467
    %1469 = vdwg.mxu0
    %vm1470 = vcmp.gt.f32.partialorder %v1448, 0.0
    %vm1471 = vcmp.gt.f32.partialorder %v1468, 0.0
    %v1472 = vmul.f32 %v1448, 0.2
    %v1473 = vmul.f32 %v1468, 0.2
    %v1474 = vsel %vm1470, %v1448, %v1472
    %v1475 = vsel %vm1471, %v1468, %v1473
    %1476 = vst [vmem:[#allocation2 + $0x28] sm:$0xf] %v1474
    %1477 = vst [vmem:[#allocation2 + $0x30] sm:$0xf] %v1475
    %v1478 = vld [vmem:[#allocation2 + $0x20] sm:$0xf]
    %v1479 = vld [vmem:[#allocation2 + $0x28] sm:$0xf]
    %v1480 = vld [vmem:[#allocation2 + $0x30] sm:$0xf]
    %v1481 = vmul.f32 %v1478, %v103
    %v1482 = vmul.f32 %v1479, %v107
    %v1483 = vmul.f32 %v1480, %v105
    %1487 = vrot.lane.b32.xlu0 %v1481, 17
    %v1488 = vpop.permute.xlu0 %1487
    %1489 = vrot.lane.b32.xlu0 %v1482, 17
    %v1490 = vpop.permute.xlu0 %1489
    %1491 = vrot.lane.b32.xlu0 %v1483, 17
    %v1492 = vpop.permute.xlu0 %1491
    %v1493 = vsel %vm85, %v1488, %v1490
    %v1494 = vsel %vm85, %v1490, %v1492
    %1497 = vst [vmem:[#allocation3 + $0x90] sm:$0xf] %v1493
    %1498 = vst [vmem:[#allocation3 + $0x98] sm:$0xf] %v1494
    %v1499 = vld [vmem:[#allocation2 + $0x20] sm:$0xf]
    %v1500 = vld [vmem:[#allocation2 + $0x28] sm:$0xf]
    %v1501 = vld [vmem:[#allocation2 + $0x30] sm:$0xf]
    %v1505 = vrot.slane %v1499, 4
    %v1506 = vrot.slane %v1500, 4
    %v1507 = vrot.slane %v1501, 4
    %1508 = vrot.lane.b32.xlu0 %v1505, 16
    %v1509 = vpop.permute.xlu0 %1508
    %1510 = vrot.lane.b32.xlu0 %v1506, 16
    %v1511 = vpop.permute.xlu0 %1510
    %1512 = vrot.lane.b32.xlu0 %v1507, 16
    %v1513 = vpop.permute.xlu0 %1512
    %v1514 = vsel %vm144, %v1509, %v1511
    %v1515 = vsel %vm144, %v1511, %v1513
    %1518 = vst [vmem:[#allocation3 + $0x90] sm:$0xf0] %v1514
    %1519 = vst [vmem:[#allocation3 + $0x98] sm:$0xf0] %v1515
    %v1520 = vld [vmem:[#allocation2 + $0x20] sm:$0xf]
    %v1521 = vld [vmem:[#allocation2 + $0x28] sm:$0xf]
    %v1522 = vld [vmem:[#allocation2 + $0x30] sm:$0xf]
    %v1523 = vmul.f32 %v1520, %v157
    %v1524 = vmul.f32 %v1521, %v161
    %v1525 = vmul.f32 %v1522, %v159
    %1529 = vrot.lane.b32.xlu0 %v1523, 15
    %v1530 = vpop.permute.xlu0 %1529
    %1531 = vrot.lane.b32.xlu0 %v1524, 15
    %v1532 = vpop.permute.xlu0 %1531
    %1533 = vrot.lane.b32.xlu0 %v1525, 15
    %v1534 = vpop.permute.xlu0 %1533
    %v1535 = vsel %vm177, %v1530, %v1532
    %v1536 = vsel %vm177, %v1532, %v1534
    %1539 = vst [vmem:[#allocation3 + $0xa0] sm:$0xf] %v1535
    %1540 = vst [vmem:[#allocation3 + $0xa8] sm:$0xf] %v1536
    %v1541 = vld [vmem:[#allocation2 + $0x20] sm:$0xf]
    %v1542 = vld [vmem:[#allocation2 + $0x28] sm:$0xf]
    %v1543 = vld [vmem:[#allocation2 + $0x30] sm:$0xf]
    %v1544 = vmul.f32 %v1541, %v188
    %v1545 = vmul.f32 %v1542, %v192
    %v1546 = vmul.f32 %v1543, %v190
    %v1550 = vrot.slane %v1544, 4
    %v1551 = vrot.slane %v1545, 4
    %v1552 = vrot.slane %v1546, 4
    %1553 = vrot.lane.b32.xlu0 %v1550, 1
    %v1554 = vpop.permute.xlu0 %1553
    %1555 = vrot.lane.b32.xlu0 %v1551, 1
    %v1556 = vpop.permute.xlu0 %1555
    %1557 = vrot.lane.b32.xlu0 %v1552, 1
    %v1558 = vpop.permute.xlu0 %1557
    %v1559 = vsel %vm211, %v1554, %v1556
    %v1560 = vsel %vm211, %v1556, %v1558
    %1563 = vst [vmem:[#allocation3 + $0xa0] sm:$0xf0] %v1559
    %1564 = vst [vmem:[#allocation3 + $0xa8] sm:$0xf0] %v1560
    %v1565 = vld [vmem:[#allocation2 + $0x28] sm:$0xf]
    %v1566 = vld [vmem:[#allocation2 + $0x30] sm:$0xf]
    %1567 = vst [vmem:[#allocation3 + $0xb0] sm:$0xf] %v1565
    %1568 = vst [vmem:[#allocation3 + $0xb8] sm:$0xf] %v1566
    %v1569 = vld [vmem:[#allocation2 + $0x28] sm:$0xf]
    %v1570 = vld [vmem:[#allocation2 + $0x30] sm:$0xf]
    %v1571 = vld [vmem:[#allocation2 + $0x38] sm:$0xf]
    %v1572 = vmul.f32 %v1569, %v226
    %v1573 = vmul.f32 %v1570, %v229
    %v1574 = vmul.f32 %v1571, %v228
    %v1578 = vrot.slane %v1572, 4
    %v1579 = vrot.slane %v1573, 4
    %v1580 = vrot.slane %v1574, 4
    %1581 = vrot.lane.b32.xlu0 %v1578, 127
    %v1582 = vpop.permute.xlu0 %1581
    %1583 = vrot.lane.b32.xlu0 %v1579, 127
    %v1584 = vpop.permute.xlu0 %1583
    %1585 = vrot.lane.b32.xlu0 %v1580, 127
    %v1586 = vpop.permute.xlu0 %1585
    %v1587 = vsel %vm191, %v1582, %v1584
    %v1588 = vsel %vm191, %v1584, %v1586
    %1591 = vst [vmem:[#allocation3 + $0xb0] sm:$0xf0] %v1587
    %1592 = vst [vmem:[#allocation3 + $0xb8] sm:$0xf0] %v1588
    %v1593 = vld [vmem:[#allocation2 + $0x28] sm:$0xf]
    %v1594 = vld [vmem:[#allocation2 + $0x30] sm:$0xf]
    %v1595 = vld [vmem:[#allocation2 + $0x38] sm:$0xf]
    %v1596 = vmul.f32 %v1593, %v258
    %v1597 = vmul.f32 %v1594, %v261
    %v1598 = vmul.f32 %v1595, %v260
    %1602 = vrot.lane.b32.xlu0 %v1596, 113
    %v1603 = vpop.permute.xlu0 %1602
    %1604 = vrot.lane.b32.xlu0 %v1597, 113
    %v1605 = vpop.permute.xlu0 %1604
    %1606 = vrot.lane.b32.xlu0 %v1598, 113
    %v1607 = vpop.permute.xlu0 %1606
    %v1608 = vsel %vm160, %v1603, %v1605
    %v1609 = vsel %vm160, %v1605, %v1607
    %1612 = vst [vmem:[#allocation3 + $0xc0] sm:$0xf] %v1608
    %1613 = vst [vmem:[#allocation3 + $0xc8] sm:$0xf] %v1609
    %v1614 = vld [vmem:[#allocation2 + $0x28] sm:$0xf]
    %v1615 = vld [vmem:[#allocation2 + $0x30] sm:$0xf]
    %v1616 = vld [vmem:[#allocation2 + $0x38] sm:$0xf]
    %v1620 = vrot.slane %v1614, 4
    %v1621 = vrot.slane %v1615, 4
    %v1622 = vrot.slane %v1616, 4
    %1623 = vrot.lane.b32.xlu0 %v1620, 112
    %v1624 = vpop.permute.xlu0 %1623
    %1625 = vrot.lane.b32.xlu0 %v1621, 112
    %v1626 = vpop.permute.xlu0 %1625
    %1627 = vrot.lane.b32.xlu0 %v1622, 112
    %v1628 = vpop.permute.xlu0 %1627
    %v1629 = vsel %vm298, %v1624, %v1626
    %v1630 = vsel %vm298, %v1626, %v1628
    %1633 = vst [vmem:[#allocation3 + $0xc0] sm:$0xf0] %v1629
    %1634 = vst [vmem:[#allocation3 + $0xc8] sm:$0xf0] %v1630
    %v1635 = vld [vmem:[#allocation2 + $0x28] sm:$0xf]
    %v1636 = vld [vmem:[#allocation2 + $0x30] sm:$0xf]
    %v1637 = vld [vmem:[#allocation2 + $0x38] sm:$0xf]
    %v1638 = vmul.f32 %v1635, %v309
    %v1639 = vmul.f32 %v1636, %v312
    %v1640 = vmul.f32 %v1637, %v311
    %1644 = vrot.lane.b32.xlu0 %v1638, 111
    %v1645 = vpop.permute.xlu0 %1644
    %1646 = vrot.lane.b32.xlu0 %v1639, 111
    %v1647 = vpop.permute.xlu0 %1646
    %1648 = vrot.lane.b32.xlu0 %v1640, 111
    %v1649 = vpop.permute.xlu0 %1648
    %v1650 = vsel %vm106, %v1645, %v1647
    %v1651 = vsel %vm106, %v1647, %v1649
    %1654 = vst [vmem:[#allocation3 + $0xd0] sm:$0xf] %v1650
    %1655 = vst [vmem:[#allocation3 + $0xd8] sm:$0xf] %v1651
    %v1656 = vld [vmem:[%s5] sm:$0xf]
    %v1657 = vld [vmem:[%s6] sm:$0xf]
    %v1658 = vld [vmem:[#allocation3] sm:$0xff]
    %v1659 = vld [vmem:[#allocation3 + $0x8] sm:$0xff]
    %v1660 = vld [vmem:[#allocation3 + $0x10] sm:$0xff]
    %v1661 = vld [vmem:[#allocation3 + $0x18] sm:$0xff]
    %v1662 = vld [vmem:[#allocation3 + $0x20] sm:$0xff]
    %v1663 = vld [vmem:[#allocation3 + $0x28] sm:$0xff]
    %v1664 = vld [vmem:[#allocation3 + $0x30] sm:$0xff]
    %v1665 = vld [vmem:[#allocation3 + $0x38] sm:$0xff]
    %v1666 = vld [vmem:[#allocation3 + $0x40] sm:$0xff]
    %v1667 = vld [vmem:[#allocation3 + $0x48] sm:$0xff]
    %v1668 = vld [vmem:[#allocation3 + $0x50] sm:$0xff]
    %v1669 = vld [vmem:[#allocation3 + $0x58] sm:$0xff]
    %v1670 = vld [vmem:[#allocation3 + $0x60] sm:$0xff]
    %v1671 = vld [vmem:[#allocation3 + $0x68] sm:$0xff]
    %v1672 = vld [vmem:[#allocation3 + $0x70] sm:$0xff]
    %v1673 = vld [vmem:[#allocation3 + $0x78] sm:$0xff]
    %v1674 = vld [vmem:[#allocation3 + $0x80] sm:$0xff]
    %v1675 = vld [vmem:[#allocation3 + $0x88] sm:$0xff]
    %v1676 = vld [vmem:[#allocation3 + $0x90] sm:$0xff]
    %v1677 = vld [vmem:[#allocation3 + $0x98] sm:$0xff]
    %v1678 = vld [vmem:[#allocation3 + $0xa0] sm:$0xff]
    %v1679 = vld [vmem:[#allocation3 + $0xa8] sm:$0xff]
    %v1680 = vld [vmem:[#allocation3 + $0xb0] sm:$0xff]
    %v1681 = vld [vmem:[#allocation3 + $0xb8] sm:$0xff]
    %v1682 = vld [vmem:[#allocation3 + $0xc0] sm:$0xff]
    %v1683 = vld [vmem:[#allocation3 + $0xc8] sm:$0xff]
    %v1684 = vld [vmem:[#allocation3 + $0xd0] sm:$0xf]
    %v1685 = vld [vmem:[#allocation3 + $0xd8] sm:$0xf]
    %1687 = vset.pattern.permute.xlu0 0
    %1688 = vperm.xlu0 %1687, %v1657
    %v1689 = vpop.permute.xlu0 %1688
    %v1692 = vsel %vm884, %v1656, 0
    %v1695 = vsel %vm355, %v1684, 0
    %v1698 = vsel %vm355, %v1685, 0
    %1700 = vmatpush.msra.mxu0 0.0
    %1701 = vmatpush.msra.mxu0 0.0
    %1702 = vmatpush.msra.mxu0 %v1695
    %1703 = vmatpush.msra.mxu0 %v1682
    %1704 = vmatpush.msra.mxu0 %v1680
    %1705 = vmatpush.msra.mxu0 %v1678
    %1706 = vmatpush.msra.mxu0 %v1676
    %1707 = vmatpush.msra.mxu0 %v1674
    %1708 = vmatpush.msra.mxu0 %v1672
    %1709 = vmatpush.msra.mxu0 %v1670
    %1710 = vmatpush.msra.mxu0 %v1668
    %1711 = vmatpush.msra.mxu0 %v1666
    %1712 = vmatpush.msra.mxu0 %v1664
    %1713 = vmatpush.msra.mxu0 %v1662
    %1714 = vmatpush.msra.mxu0 %v1660
    %1715 = vmatpush.msra.mxu0 %v1658
    %1716 = vmatmul.f32.gmra.mxu0 %v1692
    %v1717 = vpop.f32.mrf.mxu0
    %v1718 = vadd.f32 %v1689, %v1717
    %1719 = vdwg.mxu0
    %1720 = vmatpush.msra.mxu0 0.0
    %1721 = vmatpush.msra.mxu0 0.0
    %1722 = vmatpush.msra.mxu0 %v1698
    %1723 = vmatpush.msra.mxu0 %v1683
    %1724 = vmatpush.msra.mxu0 %v1681
    %1725 = vmatpush.msra.mxu0 %v1679
    %1726 = vmatpush.msra.mxu0 %v1677
    %1727 = vmatpush.msra.mxu0 %v1675
    %1728 = vmatpush.msra.mxu0 %v1673
    %1729 = vmatpush.msra.mxu0 %v1671
    %1730 = vmatpush.msra.mxu0 %v1669
    %1731 = vmatpush.msra.mxu0 %v1667
    %1732 = vmatpush.msra.mxu0 %v1665
    %1733 = vmatpush.msra.mxu0 %v1663
    %1734 = vmatpush.msra.mxu0 %v1661
    %1735 = vmatpush.msra.mxu0 %v1659
    %1736 = vmatmul.f32.gmra.mxu0 %v1692
    %v1737 = vpop.f32.mrf.mxu0
    %v1738 = vadd.f32 %v1689, %v1737
    %1739 = vdwg.mxu0
    %vm1740 = vcmp.gt.f32.partialorder %v1718, 0.0
    %vm1741 = vcmp.gt.f32.partialorder %v1738, 0.0
    %v1742 = vmul.f32 %v1718, 0.2
    %v1743 = vmul.f32 %v1738, 0.2
    %v1744 = vsel %vm1740, %v1718, %v1742
    %v1745 = vsel %vm1741, %v1738, %v1743
    %v1748 = vrot.slane %v1744, 4
    %v1749 = vrot.slane %v1745, 4
    %1752 = vst [vmem:[#allocation2 + $0x28] sm:$0xf0] %v1748
    %1753 = vst [vmem:[#allocation2 + $0x30] sm:$0xf0] %v1749
    %v1754 = vld [vmem:[#allocation2 + $0x8] sm:$0xff]
    %v1755 = vld [vmem:[#allocation2 + $0x10] sm:$0xff]
    %v1756 = vld [vmem:[#allocation2 + $0x28] sm:$0xff]
    %v1757 = vld [vmem:[#allocation2 + $0x30] sm:$0xff]
    %s1758 = scalar_lea.vmem [#allocation7], 32
    %1759 = vst [vmem:[%s1758] sm:$0xff] %v1754
    %1760 = vst [vmem:[%s1758 + $0x8] sm:$0xff] %v1755
    %1761 = vst [vmem:[%s1758 + $0x10] sm:$0xff] %v1756
    %1762 = vst [vmem:[%s1758 + $0x18] sm:$0xff] %v1757
    // Predicated region
    $region34: #{tpu_custom_call.1} parent=1 // pred_check
      _
    $region35: #{tpu_custom_call.1} parent=1 // pred_check_branch
      %1764 = sbr.rel (0) target = $region37
    $region36: #{tpu_custom_call.1} parent=1 // pred_region
      %1766 = vsyncadd [#allocation6], 0
      %s1767 = sshll.u32 [#allocation7], 4
      %s1768 = int_to_ptr.vmem [resolvable:$true] %s1767
      %s1769 = sshll.u32 %s7, 4
      %s1770 = int_to_ptr.hbm [resolvable:$true] %s1769
      %1775 = dma.vmem_to_hbm [thread:$0]  %s1768, 1024, %s1770, [#allocation6], 256, 256, 16
    $region37: #{tpu_custom_call.1} parent=1 // pred_fallthru
      _
    // Predicated region
    $region38: #{tpu_custom_call.1} parent=1 // pred_check
      _
    $region39: #{tpu_custom_call.1} parent=1 // pred_check_branch
      %1777 = sbr.rel (0) target = $region41
    $region40: #{tpu_custom_call.1} parent=1 // pred_region
      %1779 = dma.done [#allocation6], 1024
    $region41: #{tpu_custom_call.1} parent=1 // pred_fallthru
      _
    %1780 = vsyncpa [#allocation5], 1
    %1781 = vsyncpa [#allocation6], 1

</llo_original>
